<compile_context>
chip_gen: v7x
topology: tpu7x:2x2x1
jax: 0.10.0
libtpu: 0.0.40
codegen_flags: <defaults>
</compile_context>

<pallas_src>
import jax
import jax.numpy as jnp
from jax.experimental import pallas as pl
from jax.experimental.pallas import tpu as pltpu

LN_EPS = 1e-5


def _layernorm(h, gamma, beta, axis):
    """LayerNorm over `axis` (biased variance, eps inside rsqrt — PyTorch default)."""
    mu = jnp.mean(h, axis=axis, keepdims=True)
    var = jnp.mean(jnp.square(h - mu), axis=axis, keepdims=True)
    return (h - mu) * (gamma * jax.lax.rsqrt(var + LN_EPS)) + beta


def timetext_mixer_kernel(x_ref, w1_ref, w2_ref, pc_ref, w34_ref, pd_ref, o_ref):
    TB, S, D = x_ref.shape
    C = w1_ref.shape[0]

    x = x_ref[...].astype(jnp.float32)          # (TB, S, D) — D on lanes
    pc = pc_ref[...].astype(jnp.float32)        # (C, 6): b1, g1, be1, b2, g2, be2
    pd = pd_ref[...].astype(jnp.float32)        # (6, D): b3, g3, be3, b4, g4, be4

    # ---- mlp_1: mixes along seq_len; d_model stays on the lane axis ----------
    # h[b, c, d] = sum_s W1[c, s] * x[b, s, d]   (PyTorch-layout W1, no transposes)
    w1b = jnp.broadcast_to(w1_ref[...].astype(jnp.float32), (TB, C, S))
    h = jnp.einsum("bcs,bsd->bcd", w1b, x, preferred_element_type=jnp.float32)
    h = jnp.maximum(h + pc[:, 0:1], 0.0)                         # bias (C,1) -> lanes
    h = _layernorm(h, pc[:, 1:2], pc[:, 2:3], axis=1)            # reduce over C rows

    w2b = jnp.broadcast_to(w2_ref[...].astype(jnp.float32), (TB, C, C))
    h = jnp.einsum("bce,bed->bcd", w2b, h, preferred_element_type=jnp.float32)
    h = jnp.maximum(h + pc[:, 3:4], 0.0)
    h = _layernorm(h, pc[:, 4:5], pc[:, 5:6], axis=1)            # (TB, C, D)

    # ---- permute(0, 2, 1) of the reference is already satisfied: h is (b,c,d) --
    h = h.reshape(TB * C, D)                                     # free fold, D on lanes

    # ---- mlp_2: mixes along d_model; lane-dense (TB*C, D) @ (D, D) -----------
    y = jnp.dot(h, w34_ref[0], preferred_element_type=jnp.float32) + pd[0:1, :]
    y = jnp.maximum(y, 0.0)
    y = _layernorm(y, pd[1:2, :], pd[2:3, :], axis=-1)

    y = jnp.dot(y, w34_ref[1], preferred_element_type=jnp.float32) + pd[3:4, :]
    y = jnp.maximum(y, 0.0)
    y = _layernorm(y, pd[4:5, :], pd[5:6, :], axis=-1)

    o_ref[...] = y.reshape(TB, C, D).astype(o_ref.dtype)


def _choose_tb(B, S, C, D, batch_block, itemsize=4, vmem_budget=24 * 1024 * 1024):
    """Largest divisor of B that fits batch_block and the per-step VMEM budget."""
    def block_bytes(tb):
        x_blk = tb * S * D * itemsize
        o_blk = tb * C * D * itemsize
        weights = (C * S + C * C + C * 6 + 2 * D * D + 6 * D) * itemsize
        activations = 4 * tb * max(C, 8) * D * 4        # rough f32 intermediates
        return 2 * (x_blk + o_blk + weights) + activations  # double-buffered I/O

    divisors = [t for t in range(1, B + 1) if B % t == 0]
    cands = [t for t in divisors if t <= batch_block and block_bytes(t) <= vmem_budget]
    return max(cands) if cands else 1


def timetext_mixer(x, params, *, batch_block=64):
    """x: (B, seq_len, d_model) -> (B, compress_token, d_model)."""
    B, S, D = x.shape
    C = params["w1"].shape[0]
    TB = _choose_tb(B, S, C, D, batch_block)
    # TODO(synk): on v7x prefer a TB giving >= 2 'parallel' grid steps when the
    # per-step work clearly exceeds the ~0.35us step overhead (so both TCs get work).

    # ---- host-side packing (pure layout plumbing, fused by XLA) --------------
    pc = jnp.stack([params["b1"], params["g1"], params["be1"],
                    params["b2"], params["g2"], params["be2"]], axis=1)    # (C, 6)
    pd = jnp.stack([params["b3"], params["g3"], params["be3"],
                    params["b4"], params["g4"], params["be4"]], axis=0)    # (6, D)
    w34 = jnp.stack([params["w3"].T, params["w4"].T], axis=0)              # (2, D, D)

    flops = 2 * B * C * D * (S + C + 2 * D)
    transcendentals = 2 * B * (D + C)                  # one rsqrt per LayerNorm row
    bytes_accessed = int(
        (x.size + B * C * D) * jnp.dtype(x.dtype).itemsize
        + (pc.size + pd.size + w34.size + params["w1"].size + params["w2"].size) * 4
    )

    return pl.pallas_call(
        timetext_mixer_kernel,
        out_shape=jax.ShapeDtypeStruct((B, C, D), x.dtype),
        grid=(B // TB,),
        in_specs=[
            pl.BlockSpec((TB, S, D), lambda b: (b, 0, 0)),     # x (original layout)
            pl.BlockSpec((C, S), lambda b: (0, 0)),            # W1 (PyTorch layout)
            pl.BlockSpec((C, C), lambda b: (0, 0)),            # W2 (PyTorch layout)
            pl.BlockSpec((C, 6), lambda b: (0, 0)),            # packed C-sized params
            pl.BlockSpec((2, D, D), lambda b: (0, 0, 0)),      # [W3^T, W4^T]
            pl.BlockSpec((6, D), lambda b: (0, 0)),            # packed D-sized params
        ],
        out_specs=pl.BlockSpec((TB, C, D), lambda b: (b, 0, 0)),
        compiler_params=pltpu.CompilerParams(
            dimension_semantics=("parallel",),
            vmem_limit_bytes=32 * 1024 * 1024,   # safe on v5e/v6e (128 MiB) and v7x (64 MiB)
        ),
        cost_estimate=pl.CostEstimate(
            flops=flops,
            transcendentals=transcendentals,
            bytes_accessed=bytes_accessed,
        ),
    )(x, params["w1"], params["w2"], pc, w34, pd)


def init_params(key, seq_len, compress_token, d_model):
    """Deterministic parameter init (PyTorch-like uniform fan_in init)."""
    ks = jax.random.split(key, 4)

    def linear(k, out_f, in_f):
        kw, kb = jax.random.split(k)
        bound = 1.0 / jnp.sqrt(jnp.float32(in_f))
        w = jax.random.uniform(kw, (out_f, in_f), jnp.float32, -bound, bound)
        b = jax.random.uniform(kb, (out_f,), jnp.float32, -bound, bound)
        return w, b

    w1, b1 = linear(ks[0], compress_token, seq_len)
    w2, b2 = linear(ks[1], compress_token, compress_token)
    w3, b3 = linear(ks[2], d_model, d_model)
    w4, b4 = linear(ks[3], d_model, d_model)

    ones_c = jnp.ones((compress_token,), jnp.float32)
    zeros_c = jnp.zeros((compress_token,), jnp.float32)
    ones_d = jnp.ones((d_model,), jnp.float32)
    zeros_d = jnp.zeros((d_model,), jnp.float32)

    return dict(
        w1=w1, b1=b1, g1=ones_c, be1=zeros_c,
        w2=w2, b2=b2, g2=ones_c, be2=zeros_c,
        w3=w3, b3=b3, g3=ones_d, be3=zeros_d,
        w4=w4, b4=b4, g4=ones_d, be4=zeros_d,
    )


def reference(x, p):
    """Pure-JAX reference mirroring the PyTorch forward."""
    def ln(h, g, be):
        mu = jnp.mean(h, axis=-1, keepdims=True)
        var = jnp.mean(jnp.square(h - mu), axis=-1, keepdims=True)
        return (h - mu) * jax.lax.rsqrt(var + LN_EPS) * g + be

    h = jnp.transpose(x, (0, 2, 1))                     # (B, D, S)
    h = jnp.maximum(h @ p["w1"].T + p["b1"], 0.0)
    h = ln(h, p["g1"], p["be1"])
    h = jnp.maximum(h @ p["w2"].T + p["b2"], 0.0)
    h = ln(h, p["g2"], p["be2"])
    y = jnp.transpose(h, (0, 2, 1))                     # (B, C, D)
    y = jnp.maximum(y @ p["w3"].T + p["b3"], 0.0)
    y = ln(y, p["g3"], p["be3"])
    y = jnp.maximum(y @ p["w4"].T + p["b4"], 0.0)
    y = ln(y, p["g4"], p["be4"])
    return y


if __name__ == "__main__":
    # Small but TPU-friendly shapes: d_model lane-dense (multiple of 128),
    # compress_token a multiple of 8.
    B, seq_len, compress_token, d_model = 8, 16, 8, 128

    key = jax.random.PRNGKey(0)
    kx, kp = jax.random.split(key)
    x = jax.random.normal(kx, (B, seq_len, d_model), jnp.float32)
    params = init_params(kp, seq_len, compress_token, d_model)

    out = jax.block_until_ready(timetext_mixer(x, params))

    ref = reference(x, params)
    assert out.shape == (B, compress_token, d_model), out.shape
    max_err = float(jnp.max(jnp.abs(out - ref)))
    assert jnp.allclose(out, ref, atol=2e-3, rtol=2e-3), max_err
    print("KERNEL_OK")
</pallas_src>

<mosaic_0001>
module attributes {stable_mosaic.version = 11 : i64} {
  func.func @timetext_mixer_kernel(%arg0: i32, %arg1: memref<8x16x128xf32, #tpu.memory_space<vmem>>, %arg2: memref<8x16xf32, #tpu.memory_space<vmem>>, %arg3: memref<8x8xf32, #tpu.memory_space<vmem>>, %arg4: memref<8x6xf32, #tpu.memory_space<vmem>>, %arg5: memref<2x128x128xf32, #tpu.memory_space<vmem>>, %arg6: memref<6x128xf32, #tpu.memory_space<vmem>>, %arg7: memref<8x8x128xf32, #tpu.memory_space<vmem>>) attributes {dimension_semantics = [#tpu.dimension_semantics<parallel>], iteration_bounds = array<i64: 1>, scalar_prefetch = 0 : i64, scratch_operands = 0 : i64, tpu.core_type = #tpu.core_type<tc>, window_params = [{transform_indices = @transform_0, window_bounds = array<i64: 8, 16, 128>}, {pipeline_mode = #tpu.pipeline_mode<synchronous>, transform_indices = @transform_1, window_bounds = array<i64: 8, 16>}, {pipeline_mode = #tpu.pipeline_mode<synchronous>, transform_indices = @transform_2, window_bounds = array<i64: 8, 8>}, {pipeline_mode = #tpu.pipeline_mode<synchronous>, transform_indices = @transform_3, window_bounds = array<i64: 8, 6>}, {pipeline_mode = #tpu.pipeline_mode<synchronous>, transform_indices = @transform_4, window_bounds = array<i64: 2, 128, 128>}, {pipeline_mode = #tpu.pipeline_mode<synchronous>, transform_indices = @transform_5, window_bounds = array<i64: 6, 128>}, {transform_indices = @transform_6, window_bounds = array<i64: 8, 8, 128>}]} {
    %c0 = arith.constant 0 : index
    %c0_0 = arith.constant 0 : index
    %c0_1 = arith.constant 0 : index
    %0 = vector.load %arg1[%c0, %c0_0, %c0_1] : memref<8x16x128xf32, #tpu.memory_space<vmem>>, vector<8x16x128xf32>
    %c0_2 = arith.constant 0 : index
    %c0_3 = arith.constant 0 : index
    %1 = vector.load %arg4[%c0_2, %c0_3] : memref<8x6xf32, #tpu.memory_space<vmem>>, vector<8x6xf32>
    %c0_4 = arith.constant 0 : index
    %c0_5 = arith.constant 0 : index
    %2 = vector.load %arg6[%c0_4, %c0_5] : memref<6x128xf32, #tpu.memory_space<vmem>>, vector<6x128xf32>
    %c0_6 = arith.constant 0 : index
    %c0_7 = arith.constant 0 : index
    %3 = vector.load %arg2[%c0_6, %c0_7] : memref<8x16xf32, #tpu.memory_space<vmem>>, vector<8x16xf32>
    %4 = vector.shape_cast %3 : vector<8x16xf32> to vector<1x8x16xf32>
    %5 = vector.broadcast %4 : vector<1x8x16xf32> to vector<8x8x16xf32>
    "tpu.trace_start"() <{level = 10 : i32, message = "bcs,bsd->bcd"}> : () -> ()
    %cst = arith.constant dense<0.000000e+00> : vector<8x8x128xf32>
    %6 = tpu.matmul %5, %0, %cst {dimension_numbers = #tpu.dot_dimension_numbers<[2], [1], [1], [2], [0, 0, 0, 1, 1, 2], [0], [0]>} : vector<8x8x16xf32>, vector<8x16x128xf32>, vector<8x8x128xf32> -> vector<8x8x128xf32>
    "tpu.trace_stop"() : () -> ()
    %7 = vector.extract_strided_slice %1 {offsets = [0, 0], sizes = [8, 1], strides = [1, 1]} : vector<8x6xf32> to vector<8x1xf32>
    %8 = vector.shape_cast %7 : vector<8x1xf32> to vector<1x8x1xf32>
    %9 = vector.broadcast %8 : vector<1x8x1xf32> to vector<8x8x128xf32>
    %10 = arith.addf %6, %9 : vector<8x8x128xf32>
    %cst_8 = arith.constant 0.000000e+00 : f32
    %11 = vector.broadcast %cst_8 : f32 to vector<8x8x128xf32>
    %12 = arith.maximumf %10, %11 : vector<8x8x128xf32>
    %13 = vector.extract_strided_slice %1 {offsets = [0, 1], sizes = [8, 1], strides = [1, 1]} : vector<8x6xf32> to vector<8x1xf32>
    %14 = vector.extract_strided_slice %1 {offsets = [0, 2], sizes = [8, 1], strides = [1, 1]} : vector<8x6xf32> to vector<8x1xf32>
    %cst_9 = arith.constant dense<0.000000e+00> : vector<8x128xf32>
    %15 = vector.multi_reduction <add>, %12, %cst_9 [1] : vector<8x8x128xf32> to vector<8x128xf32>
    %16 = vector.shape_cast %15 : vector<8x128xf32> to vector<8x1x128xf32>
    %cst_10 = arith.constant 8.000000e+00 : f32
    %17 = vector.broadcast %cst_10 : f32 to vector<8x1x128xf32>
    %18 = arith.divf %16, %17 : vector<8x1x128xf32>
    %19 = vector.broadcast %18 : vector<8x1x128xf32> to vector<8x8x128xf32>
    %20 = arith.subf %12, %19 : vector<8x8x128xf32>
    %21 = arith.mulf %20, %20 : vector<8x8x128xf32>
    %cst_11 = arith.constant dense<0.000000e+00> : vector<8x128xf32>
    %22 = vector.multi_reduction <add>, %21, %cst_11 [1] : vector<8x8x128xf32> to vector<8x128xf32>
    %23 = vector.shape_cast %22 : vector<8x128xf32> to vector<8x1x128xf32>
    %cst_12 = arith.constant 8.000000e+00 : f32
    %24 = vector.broadcast %cst_12 : f32 to vector<8x1x128xf32>
    %25 = arith.divf %23, %24 : vector<8x1x128xf32>
    %26 = vector.broadcast %18 : vector<8x1x128xf32> to vector<8x8x128xf32>
    %27 = arith.subf %12, %26 : vector<8x8x128xf32>
    %cst_13 = arith.constant 9.99999974E-6 : f32
    %28 = vector.broadcast %cst_13 : f32 to vector<8x1x128xf32>
    %29 = arith.addf %25, %28 : vector<8x1x128xf32>
    %30 = math.rsqrt %29 : vector<8x1x128xf32>
    %31 = vector.shape_cast %13 : vector<8x1xf32> to vector<1x8x1xf32>
    %32 = vector.broadcast %31 : vector<1x8x1xf32> to vector<8x8x128xf32>
    %33 = vector.broadcast %30 : vector<8x1x128xf32> to vector<8x8x128xf32>
    %34 = arith.mulf %32, %33 : vector<8x8x128xf32>
    %35 = arith.mulf %27, %34 : vector<8x8x128xf32>
    %36 = vector.shape_cast %14 : vector<8x1xf32> to vector<1x8x1xf32>
    %37 = vector.broadcast %36 : vector<1x8x1xf32> to vector<8x8x128xf32>
    %38 = arith.addf %35, %37 : vector<8x8x128xf32>
    %c0_14 = arith.constant 0 : index
    %c0_15 = arith.constant 0 : index
    %39 = vector.load %arg3[%c0_14, %c0_15] : memref<8x8xf32, #tpu.memory_space<vmem>>, vector<8x8xf32>
    %40 = vector.shape_cast %39 : vector<8x8xf32> to vector<1x8x8xf32>
    %41 = vector.broadcast %40 : vector<1x8x8xf32> to vector<8x8x8xf32>
    "tpu.trace_start"() <{level = 10 : i32, message = "bce,bed->bcd"}> : () -> ()
    %cst_16 = arith.constant dense<0.000000e+00> : vector<8x8x128xf32>
    %42 = tpu.matmul %41, %38, %cst_16 {dimension_numbers = #tpu.dot_dimension_numbers<[2], [1], [1], [2], [0, 0, 0, 1, 1, 2], [0], [0]>} : vector<8x8x8xf32>, vector<8x8x128xf32>, vector<8x8x128xf32> -> vector<8x8x128xf32>
    "tpu.trace_stop"() : () -> ()
    %43 = vector.extract_strided_slice %1 {offsets = [0, 3], sizes = [8, 1], strides = [1, 1]} : vector<8x6xf32> to vector<8x1xf32>
    %44 = vector.shape_cast %43 : vector<8x1xf32> to vector<1x8x1xf32>
    %45 = vector.broadcast %44 : vector<1x8x1xf32> to vector<8x8x128xf32>
    %46 = arith.addf %42, %45 : vector<8x8x128xf32>
    %cst_17 = arith.constant 0.000000e+00 : f32
    %47 = vector.broadcast %cst_17 : f32 to vector<8x8x128xf32>
    %48 = arith.maximumf %46, %47 : vector<8x8x128xf32>
    %49 = vector.extract_strided_slice %1 {offsets = [0, 4], sizes = [8, 1], strides = [1, 1]} : vector<8x6xf32> to vector<8x1xf32>
    %50 = vector.extract_strided_slice %1 {offsets = [0, 5], sizes = [8, 1], strides = [1, 1]} : vector<8x6xf32> to vector<8x1xf32>
    %cst_18 = arith.constant dense<0.000000e+00> : vector<8x128xf32>
    %51 = vector.multi_reduction <add>, %48, %cst_18 [1] : vector<8x8x128xf32> to vector<8x128xf32>
    %52 = vector.shape_cast %51 : vector<8x128xf32> to vector<8x1x128xf32>
    %cst_19 = arith.constant 8.000000e+00 : f32
    %53 = vector.broadcast %cst_19 : f32 to vector<8x1x128xf32>
    %54 = arith.divf %52, %53 : vector<8x1x128xf32>
    %55 = vector.broadcast %54 : vector<8x1x128xf32> to vector<8x8x128xf32>
    %56 = arith.subf %48, %55 : vector<8x8x128xf32>
    %57 = arith.mulf %56, %56 : vector<8x8x128xf32>
    %cst_20 = arith.constant dense<0.000000e+00> : vector<8x128xf32>
    %58 = vector.multi_reduction <add>, %57, %cst_20 [1] : vector<8x8x128xf32> to vector<8x128xf32>
    %59 = vector.shape_cast %58 : vector<8x128xf32> to vector<8x1x128xf32>
    %cst_21 = arith.constant 8.000000e+00 : f32
    %60 = vector.broadcast %cst_21 : f32 to vector<8x1x128xf32>
    %61 = arith.divf %59, %60 : vector<8x1x128xf32>
    %62 = vector.broadcast %54 : vector<8x1x128xf32> to vector<8x8x128xf32>
    %63 = arith.subf %48, %62 : vector<8x8x128xf32>
    %cst_22 = arith.constant 9.99999974E-6 : f32
    %64 = vector.broadcast %cst_22 : f32 to vector<8x1x128xf32>
    %65 = arith.addf %61, %64 : vector<8x1x128xf32>
    %66 = math.rsqrt %65 : vector<8x1x128xf32>
    %67 = vector.shape_cast %49 : vector<8x1xf32> to vector<1x8x1xf32>
    %68 = vector.broadcast %67 : vector<1x8x1xf32> to vector<8x8x128xf32>
    %69 = vector.broadcast %66 : vector<8x1x128xf32> to vector<8x8x128xf32>
    %70 = arith.mulf %68, %69 : vector<8x8x128xf32>
    %71 = arith.mulf %63, %70 : vector<8x8x128xf32>
    %72 = vector.shape_cast %50 : vector<8x1xf32> to vector<1x8x1xf32>
    %73 = vector.broadcast %72 : vector<1x8x1xf32> to vector<8x8x128xf32>
    %74 = arith.addf %71, %73 : vector<8x8x128xf32>
    %75 = vector.shape_cast %74 : vector<8x8x128xf32> to vector<64x128xf32>
    %c0_23 = arith.constant 0 : index
    %c0_24 = arith.constant 0 : index
    %c0_25 = arith.constant 0 : index
    %76 = vector.load %arg5[%c0_23, %c0_24, %c0_25] : memref<2x128x128xf32, #tpu.memory_space<vmem>>, vector<1x128x128xf32>
    %77 = vector.shape_cast %76 : vector<1x128x128xf32> to vector<128x128xf32>
    %cst_26 = arith.constant dense<0.000000e+00> : vector<64x128xf32>
    %78 = tpu.matmul %75, %77, %cst_26 {dimension_numbers = #tpu.dot_dimension_numbers<[1], [0], [0], [1], [0, 0, 1, 1], [], []>} : vector<64x128xf32>, vector<128x128xf32>, vector<64x128xf32> -> vector<64x128xf32>
    %79 = vector.extract_strided_slice %2 {offsets = [0, 0], sizes = [1, 128], strides = [1, 1]} : vector<6x128xf32> to vector<1x128xf32>
    %80 = vector.broadcast %79 : vector<1x128xf32> to vector<64x128xf32>
    %81 = arith.addf %78, %80 : vector<64x128xf32>
    %cst_27 = arith.constant 0.000000e+00 : f32
    %82 = vector.broadcast %cst_27 : f32 to vector<64x128xf32>
    %83 = arith.maximumf %81, %82 : vector<64x128xf32>
    %84 = vector.extract_strided_slice %2 {offsets = [1, 0], sizes = [1, 128], strides = [1, 1]} : vector<6x128xf32> to vector<1x128xf32>
    %85 = vector.extract_strided_slice %2 {offsets = [2, 0], sizes = [1, 128], strides = [1, 1]} : vector<6x128xf32> to vector<1x128xf32>
    %cst_28 = arith.constant dense<0.000000e+00> : vector<64xf32>
    %86 = vector.multi_reduction <add>, %83, %cst_28 [1] : vector<64x128xf32> to vector<64xf32>
    %87 = vector.shape_cast %86 : vector<64xf32> to vector<64x1xf32>
    %cst_29 = arith.constant 1.280000e+02 : f32
    %88 = vector.broadcast %cst_29 : f32 to vector<64x1xf32>
    %89 = arith.divf %87, %88 : vector<64x1xf32>
    %90 = vector.broadcast %89 : vector<64x1xf32> to vector<64x128xf32>
    %91 = arith.subf %83, %90 : vector<64x128xf32>
    %92 = arith.mulf %91, %91 : vector<64x128xf32>
    %cst_30 = arith.constant dense<0.000000e+00> : vector<64xf32>
    %93 = vector.multi_reduction <add>, %92, %cst_30 [1] : vector<64x128xf32> to vector<64xf32>
    %94 = vector.shape_cast %93 : vector<64xf32> to vector<64x1xf32>
    %cst_31 = arith.constant 1.280000e+02 : f32
    %95 = vector.broadcast %cst_31 : f32 to vector<64x1xf32>
    %96 = arith.divf %94, %95 : vector<64x1xf32>
    %97 = vector.broadcast %89 : vector<64x1xf32> to vector<64x128xf32>
    %98 = arith.subf %83, %97 : vector<64x128xf32>
    %cst_32 = arith.constant 9.99999974E-6 : f32
    %99 = vector.broadcast %cst_32 : f32 to vector<64x1xf32>
    %100 = arith.addf %96, %99 : vector<64x1xf32>
    %101 = math.rsqrt %100 : vector<64x1xf32>
    %102 = vector.broadcast %84 : vector<1x128xf32> to vector<64x128xf32>
    %103 = vector.broadcast %101 : vector<64x1xf32> to vector<64x128xf32>
    %104 = arith.mulf %102, %103 : vector<64x128xf32>
    %105 = arith.mulf %98, %104 : vector<64x128xf32>
    %106 = vector.broadcast %85 : vector<1x128xf32> to vector<64x128xf32>
    %107 = arith.addf %105, %106 : vector<64x128xf32>
    %c1 = arith.constant 1 : index
    %c0_33 = arith.constant 0 : index
    %c0_34 = arith.constant 0 : index
    %108 = vector.load %arg5[%c1, %c0_33, %c0_34] : memref<2x128x128xf32, #tpu.memory_space<vmem>>, vector<1x128x128xf32>
    %109 = vector.shape_cast %108 : vector<1x128x128xf32> to vector<128x128xf32>
    %cst_35 = arith.constant dense<0.000000e+00> : vector<64x128xf32>
    %110 = tpu.matmul %107, %109, %cst_35 {dimension_numbers = #tpu.dot_dimension_numbers<[1], [0], [0], [1], [0, 0, 1, 1], [], []>} : vector<64x128xf32>, vector<128x128xf32>, vector<64x128xf32> -> vector<64x128xf32>
    %111 = vector.extract_strided_slice %2 {offsets = [3, 0], sizes = [1, 128], strides = [1, 1]} : vector<6x128xf32> to vector<1x128xf32>
    %112 = vector.broadcast %111 : vector<1x128xf32> to vector<64x128xf32>
    %113 = arith.addf %110, %112 : vector<64x128xf32>
    %cst_36 = arith.constant 0.000000e+00 : f32
    %114 = vector.broadcast %cst_36 : f32 to vector<64x128xf32>
    %115 = arith.maximumf %113, %114 : vector<64x128xf32>
    %116 = vector.extract_strided_slice %2 {offsets = [4, 0], sizes = [1, 128], strides = [1, 1]} : vector<6x128xf32> to vector<1x128xf32>
    %117 = vector.extract_strided_slice %2 {offsets = [5, 0], sizes = [1, 128], strides = [1, 1]} : vector<6x128xf32> to vector<1x128xf32>
    %cst_37 = arith.constant dense<0.000000e+00> : vector<64xf32>
    %118 = vector.multi_reduction <add>, %115, %cst_37 [1] : vector<64x128xf32> to vector<64xf32>
    %119 = vector.shape_cast %118 : vector<64xf32> to vector<64x1xf32>
    %cst_38 = arith.constant 1.280000e+02 : f32
    %120 = vector.broadcast %cst_38 : f32 to vector<64x1xf32>
    %121 = arith.divf %119, %120 : vector<64x1xf32>
    %122 = vector.broadcast %121 : vector<64x1xf32> to vector<64x128xf32>
    %123 = arith.subf %115, %122 : vector<64x128xf32>
    %124 = arith.mulf %123, %123 : vector<64x128xf32>
    %cst_39 = arith.constant dense<0.000000e+00> : vector<64xf32>
    %125 = vector.multi_reduction <add>, %124, %cst_39 [1] : vector<64x128xf32> to vector<64xf32>
    %126 = vector.shape_cast %125 : vector<64xf32> to vector<64x1xf32>
    %cst_40 = arith.constant 1.280000e+02 : f32
    %127 = vector.broadcast %cst_40 : f32 to vector<64x1xf32>
    %128 = arith.divf %126, %127 : vector<64x1xf32>
    %129 = vector.broadcast %121 : vector<64x1xf32> to vector<64x128xf32>
    %130 = arith.subf %115, %129 : vector<64x128xf32>
    %cst_41 = arith.constant 9.99999974E-6 : f32
    %131 = vector.broadcast %cst_41 : f32 to vector<64x1xf32>
    %132 = arith.addf %128, %131 : vector<64x1xf32>
    %133 = math.rsqrt %132 : vector<64x1xf32>
    %134 = vector.broadcast %116 : vector<1x128xf32> to vector<64x128xf32>
    %135 = vector.broadcast %133 : vector<64x1xf32> to vector<64x128xf32>
    %136 = arith.mulf %134, %135 : vector<64x128xf32>
    %137 = arith.mulf %130, %136 : vector<64x128xf32>
    %138 = vector.broadcast %117 : vector<1x128xf32> to vector<64x128xf32>
    %139 = arith.addf %137, %138 : vector<64x128xf32>
    %140 = vector.shape_cast %139 : vector<64x128xf32> to vector<8x8x128xf32>
    %c0_42 = arith.constant 0 : index
    %c0_43 = arith.constant 0 : index
    %c0_44 = arith.constant 0 : index
    %141 = vector.load %arg7[%c0_42, %c0_43, %c0_44] : memref<8x8x128xf32, #tpu.memory_space<vmem>>, vector<8x8x128xf32>
    tpu.vector_store %arg7[%c0_42, %c0_43, %c0_44], %140 {strides = array<i32>} : memref<8x8x128xf32, #tpu.memory_space<vmem>>, vector<8x8x128xf32>,
    return
  }
  func.func @transform_0(%arg0: i32) -> (i32, i32, i32) {
    %c0_i32 = arith.constant 0 : i32
    %c0_i32_0 = arith.constant 0 : i32
    %c0_i32_1 = arith.constant 0 : i32
    return %arg0, %c0_i32, %c0_i32_0 : i32, i32, i32
  }
  func.func @transform_1(%arg0: i32) -> (i32, i32) {
    %c0_i32 = arith.constant 0 : i32
    %c0_i32_0 = arith.constant 0 : i32
    %c0_i32_1 = arith.constant 0 : i32
    return %c0_i32, %c0_i32_0 : i32, i32
  }
  func.func @transform_2(%arg0: i32) -> (i32, i32) {
    %c0_i32 = arith.constant 0 : i32
    %c0_i32_0 = arith.constant 0 : i32
    %c0_i32_1 = arith.constant 0 : i32
    return %c0_i32, %c0_i32_0 : i32, i32
  }
  func.func @transform_3(%arg0: i32) -> (i32, i32) {
    %c0_i32 = arith.constant 0 : i32
    %c0_i32_0 = arith.constant 0 : i32
    %c0_i32_1 = arith.constant 0 : i32
    return %c0_i32, %c0_i32_0 : i32, i32
  }
  func.func @transform_4(%arg0: i32) -> (i32, i32, i32) {
    %c0_i32 = arith.constant 0 : i32
    %c0_i32_0 = arith.constant 0 : i32
    %c0_i32_1 = arith.constant 0 : i32
    %c0_i32_2 = arith.constant 0 : i32
    return %c0_i32, %c0_i32_0, %c0_i32_1 : i32, i32, i32
  }
  func.func @transform_5(%arg0: i32) -> (i32, i32) {
    %c0_i32 = arith.constant 0 : i32
    %c0_i32_0 = arith.constant 0 : i32
    %c0_i32_1 = arith.constant 0 : i32
    return %c0_i32, %c0_i32_0 : i32, i32
  }
  func.func @transform_6(%arg0: i32) -> (i32, i32, i32) {
    %c0_i32 = arith.constant 0 : i32
    %c0_i32_0 = arith.constant 0 : i32
    %c0_i32_1 = arith.constant 0 : i32
    return %arg0, %c0_i32, %c0_i32_0 : i32, i32, i32
  }
}

</mosaic_0001>

<llo_original>
// kernel: tpu_custom_call.1
$region0: #{tpu_custom_call.1}
  #allocation0 [shape = 'u32[]', space=smem, size = 0x4, offset = 0x4, fixed_abs, tag = 'smem constant byte address 0x4 - core index']
  #allocation1 [shape = 'u32[144,128]{1,0:T(1,128)}', space=vmem, size = 0x12000, scoped, tag = 'internal scratch']
  %s0 = inlined_call_operand.hbm [shape: f32[8,16,128], index: 0, kind: input, shape index: {}]
  %s1 = inlined_call_operand.hbm [shape: f32[8,16], index: 1, kind: input, shape index: {}]
  %s2 = inlined_call_operand.hbm [shape: f32[8,8], index: 2, kind: input, shape index: {}]
  %s3 = inlined_call_operand.vmem [shape: f32[8,6], index: 3, kind: input, shape index: {}]
  %s4 = inlined_call_operand.hbm [shape: f32[2,128,128], index: 4, kind: input, shape index: {}]
  %s5 = inlined_call_operand.vmem [shape: f32[6,128], index: 5, kind: input, shape index: {}]
  %s6 = inlined_call_operand.hbm [shape: f32[8,8,128], index: 6, kind: output, shape index: {}]
  %s7 = sld [smem:[#allocation0]]
  $region50: #{tpu_custom_call.1} parent=0
    _
  %s9 = ssub.s32 1, %s7
  %s10 = scalar_select 0, %s9, %s7
  $region1: #{tpu_custom_call.1} parent=0
    #allocation2 [shape = 'u8[65536]{0}', space=vmem, size = 0x10000, scoped, tag = 'input window, operand 0, single buffered']
    #allocation3 [shape = 's32[1]{0}', space=sflag, size = 0x4, scoped, tag = 'scoped memory for tpu_custom_call.1']
    #allocation4 [shape = 's32[1]{0}', space=sflag, size = 0x4, scoped, tag = 'scoped memory for tpu_custom_call.1']
    #allocation5 [shape = 'u8[4096]{0}', space=vmem, size = 0x1000, scoped, tag = 'input window, operand 1, single buffered']
    #allocation6 [shape = 's32[1]{0}', space=sflag, size = 0x4, scoped, tag = 'scoped memory for tpu_custom_call.1']
    #allocation7 [shape = 'u8[4096]{0}', space=vmem, size = 0x1000, scoped, tag = 'input window, operand 2, single buffered']
    #allocation8 [shape = 'u8[131072]{0}', space=vmem, size = 0x20000, scoped, tag = 'input window, operand 4, single buffered']
    #allocation9 [shape = 's32[1]{0}', space=sflag, size = 0x4, scoped, tag = 'scoped memory for tpu_custom_call.1']
    #allocation10 [shape = 'u8[32768]{0}', space=vmem, size = 0x8000, scoped, tag = 'output window, operand 0, single buffered']
    %11 = vsyncpa [#allocation3], 0
    %12 = vsyncpa [#allocation6], 0
    %13 = vsyncpa [#allocation9], 0
    %14 = vsyncpa [#allocation4], 0
    // Predicated region
    $region2: #{tpu_custom_call.1} parent=1 // pred_check
      _
    $region3: #{tpu_custom_call.1} parent=1 // pred_check_branch
      %16 = sbr.rel (0) target = $region5
    $region4: #{tpu_custom_call.1} parent=1 // pred_region
      %s18 = ssub.s32 2048, 2048
      %19 = vsyncadd [#allocation3], %s18
      %s20 = sshll.u32 [#allocation2], 4
      %s21 = int_to_ptr.vmem [resolvable:$true] %s20
      %26 = dma.hbm_to_vmem [thread:$0]  %s0, 2048, %s21, [#allocation3], 128, 128, 8
    $region5: #{tpu_custom_call.1} parent=1 // pred_fallthru
      _
    // Predicated region
    $region6: #{tpu_custom_call.1} parent=1 // pred_check
      _
    $region7: #{tpu_custom_call.1} parent=1 // pred_check_branch
      %28 = sbr.rel (0) target = $region9
    $region8: #{tpu_custom_call.1} parent=1 // pred_region
      %s30 = ssub.s32 128, 128
      %31 = vsyncadd [#allocation6], %s30
      %s33 = sshll.u32 [#allocation5], 4
      %s34 = int_to_ptr.vmem [resolvable:$true] %s33
      %36 = dma.hbm_to_vmem [thread:$0]  %s1, 128, %s34, [#allocation6]
    $region9: #{tpu_custom_call.1} parent=1 // pred_fallthru
      _
    // Predicated region
    $region10: #{tpu_custom_call.1} parent=1 // pred_check
      _
    $region11: #{tpu_custom_call.1} parent=1 // pred_check_branch
      %38 = sbr.rel (0) target = $region13
    $region12: #{tpu_custom_call.1} parent=1 // pred_region
      %s40 = ssub.s32 128, 128
      %41 = vsyncadd [#allocation6], %s40
      %s43 = sshll.u32 [#allocation7], 4
      %s44 = int_to_ptr.vmem [resolvable:$true] %s43
      %46 = dma.hbm_to_vmem [thread:$0]  %s2, 128, %s44, [#allocation6]
    $region13: #{tpu_custom_call.1} parent=1 // pred_fallthru
      _
    // Predicated region
    $region14: #{tpu_custom_call.1} parent=1 // pred_check
      _
    $region15: #{tpu_custom_call.1} parent=1 // pred_check_branch
      %48 = sbr.rel (0) target = $region17
    $region16: #{tpu_custom_call.1} parent=1 // pred_region
      _
    $region17: #{tpu_custom_call.1} parent=1 // pred_fallthru
      _
    // Predicated region
    $region18: #{tpu_custom_call.1} parent=1 // pred_check
      _
    $region19: #{tpu_custom_call.1} parent=1 // pred_check_branch
      %50 = sbr.rel (0) target = $region21
    $region20: #{tpu_custom_call.1} parent=1 // pred_region
      %s52 = ssub.s32 4096, 4096
      %53 = vsyncadd [#allocation9], %s52
      %s54 = sshll.u32 [#allocation8], 4
      %s55 = int_to_ptr.vmem [resolvable:$true] %s54
      %60 = dma.hbm_to_vmem [thread:$0]  %s4, 4096, %s55, [#allocation9], 128, 128, 8
    $region21: #{tpu_custom_call.1} parent=1 // pred_fallthru
      _
    // Predicated region
    $region22: #{tpu_custom_call.1} parent=1 // pred_check
      _
    $region23: #{tpu_custom_call.1} parent=1 // pred_check_branch
      %62 = sbr.rel (0) target = $region25
    $region24: #{tpu_custom_call.1} parent=1 // pred_region
      _
    $region25: #{tpu_custom_call.1} parent=1 // pred_fallthru
      _
    // Predicated region
    $region26: #{tpu_custom_call.1} parent=1 // pred_check
      _
    $region27: #{tpu_custom_call.1} parent=1 // pred_check_branch
      %64 = sbr.rel (0) target = $region29
    $region28: #{tpu_custom_call.1} parent=1 // pred_region
      %65 = dma.done [#allocation3], 2048
    $region29: #{tpu_custom_call.1} parent=1 // pred_fallthru
      _
    // Predicated region
    $region30: #{tpu_custom_call.1} parent=1 // pred_check
      _
    $region31: #{tpu_custom_call.1} parent=1 // pred_check_branch
      %67 = sbr.rel (0) target = $region33
    $region32: #{tpu_custom_call.1} parent=1 // pred_region
      %68 = dma.done [#allocation6], 128
    $region33: #{tpu_custom_call.1} parent=1 // pred_fallthru
      _
    // Predicated region
    $region34: #{tpu_custom_call.1} parent=1 // pred_check
      _
    $region35: #{tpu_custom_call.1} parent=1 // pred_check_branch
      %70 = sbr.rel (0) target = $region37
    $region36: #{tpu_custom_call.1} parent=1 // pred_region
      %71 = dma.done [#allocation6], 128
    $region37: #{tpu_custom_call.1} parent=1 // pred_fallthru
      _
    // Predicated region
    $region38: #{tpu_custom_call.1} parent=1 // pred_check
      _
    $region39: #{tpu_custom_call.1} parent=1 // pred_check_branch
      %73 = sbr.rel (0) target = $region41
    $region40: #{tpu_custom_call.1} parent=1 // pred_region
      %74 = dma.done [#allocation9], 4096
    $region41: #{tpu_custom_call.1} parent=1 // pred_fallthru
      _
    %v75 = vld [vmem:[#allocation2] sm:$0xff]
    %v76 = vld [vmem:[#allocation2 + $0x8] sm:$0xff]
    %v77 = vld [vmem:[#allocation2 + $0x10] sm:$0xff]
    %v78 = vld [vmem:[#allocation2 + $0x18] sm:$0xff]
    %v79 = vld [vmem:[#allocation2 + $0x20] sm:$0xff]
    %v80 = vld [vmem:[#allocation2 + $0x28] sm:$0xff]
    %v81 = vld [vmem:[#allocation2 + $0x30] sm:$0xff]
    %v82 = vld [vmem:[#allocation2 + $0x38] sm:$0xff]
    %v83 = vld [vmem:[#allocation2 + $0x40] sm:$0xff]
    %v84 = vld [vmem:[#allocation2 + $0x48] sm:$0xff]
    %v85 = vld [vmem:[#allocation2 + $0x50] sm:$0xff]
    %v86 = vld [vmem:[#allocation2 + $0x58] sm:$0xff]
    %v87 = vld [vmem:[#allocation2 + $0x60] sm:$0xff]
    %v88 = vld [vmem:[#allocation2 + $0x68] sm:$0xff]
    %v89 = vld [vmem:[#allocation2 + $0x70] sm:$0xff]
    %v90 = vld [vmem:[#allocation2 + $0x78] sm:$0xff]
    %v91 = vld [vmem:[%s3] sm:$0xff]
    %v92 = vld [vmem:[%s5] sm:$0x3f]
    %v93 = vld [vmem:[#allocation5] sm:$0xff]
    %95 = vset.pattern.permute.xlu0 0
    %96 = vperm.xlu0 %95, %v91
    %v97 = vpop.permute.xlu0 %96
    %vm99 = vcmask 130048
    %v101 = vsel %vm99, %v93, 0
    %103 = vmatprep.subr.mxu0 0.0
    %104 = vmatpush1.msra.mxu0 %v75
    %105 = vmatprep.subr.mxu0 0.0
    %106 = vmatpush1.msra.mxu0 %v76
    %107 = vmatprep.subr.mxu0 0.0
    %108 = vmatpush1.msra.mxu0 0.0
    %109 = vmatprep.subr.mxu0 0.0
    %110 = vmatpush1.msra.mxu0 0.0
    %111 = vmatprep.subr.mxu0 0.0
    %112 = vmatpush1.msra.mxu0 0.0
    %113 = vmatprep.subr.mxu0 0.0
    %114 = vmatpush1.msra.mxu0 0.0
    %115 = vmatprep.subr.mxu0 0.0
    %116 = vmatpush1.msra.mxu0 0.0
    %117 = vmatprep.subr.mxu0 0.0
    %118 = vmatpush1.msra.mxu0 0.0
    %119 = vmatprep.subr.mxu0 0.0
    %120 = vmatpush1.msra.mxu0 0.0
    %121 = vmatprep.subr.mxu0 0.0
    %122 = vmatpush1.msra.mxu0 0.0
    %123 = vmatprep.subr.mxu0 0.0
    %124 = vmatpush1.msra.mxu0 0.0
    %125 = vmatprep.subr.mxu0 0.0
    %126 = vmatpush1.msra.mxu0 0.0
    %127 = vmatprep.subr.mxu0 0.0
    %128 = vmatpush1.msra.mxu0 0.0
    %129 = vmatprep.subr.mxu0 0.0
    %130 = vmatpush1.msra.mxu0 0.0
    %131 = vmatprep.subr.mxu0 0.0
    %132 = vmatpush1.msra.mxu0 0.0
    %133 = vmatprep.subr.mxu0 0.0
    %134 = vmatpush1.msra.mxu0 0.0
    %135 = vmatprep.subr.mxu0 0.0
    %136 = vmatpush1.msra.mxu0 0.0
    %137 = vmatprep.subr.mxu0 0.0
    %138 = vmatpush1.msra.mxu0 0.0
    %139 = vmatprep.subr.mxu0 0.0
    %140 = vmatpush1.msra.mxu0 0.0
    %141 = vmatprep.subr.mxu0 0.0
    %142 = vmatpush1.msra.mxu0 0.0
    %143 = vmatprep.subr.mxu0 0.0
    %144 = vmatpush1.msra.mxu0 0.0
    %145 = vmatprep.subr.mxu0 0.0
    %146 = vmatpush1.msra.mxu0 0.0
    %147 = vmatprep.subr.mxu0 0.0
    %148 = vmatpush1.msra.mxu0 0.0
    %149 = vmatprep.subr.mxu0 0.0
    %150 = vmatpush1.msra.mxu0 0.0
    %151 = vmatprep.subr.mxu0 0.0
    %152 = vmatpush1.msra.mxu0 0.0
    %153 = vmatprep.subr.mxu0 0.0
    %154 = vmatpush1.msra.mxu0 0.0
    %155 = vmatprep.subr.mxu0 0.0
    %156 = vmatpush1.msra.mxu0 0.0
    %157 = vmatprep.subr.mxu0 0.0
    %158 = vmatpush1.msra.mxu0 0.0
    %159 = vmatprep.subr.mxu0 0.0
    %160 = vmatpush1.msra.mxu0 0.0
    %161 = vmatprep.subr.mxu0 0.0
    %162 = vmatpush1.msra.mxu0 0.0
    %163 = vmatprep.subr.mxu0 0.0
    %164 = vmatpush1.msra.mxu0 0.0
    %165 = vmatprep.subr.mxu0 0.0
    %166 = vmatpush1.msra.mxu0 0.0
    %167 = vmatprep.mubr.f32.mxu0 0.0
    %168 = vmatmul.mubr.f32.gmra.mrb[0].mxu0 %v101
    %v169 = vpop.f32.mrb[0].mxu0
    %v170 = vadd.f32 %v97, %v169
    %v171 = vpop.f32.mrb[0].mxu0
    %172 = vdwg.mxu0
    %173 = vmatprep.subr.mxu0 0.0
    %174 = vmatpush1.msra.mxu0 %v77
    %175 = vmatprep.subr.mxu0 0.0
    %176 = vmatpush1.msra.mxu0 %v78
    %177 = vmatprep.subr.mxu0 0.0
    %178 = vmatpush1.msra.mxu0 0.0
    %179 = vmatprep.subr.mxu0 0.0
    %180 = vmatpush1.msra.mxu0 0.0
    %181 = vmatprep.subr.mxu0 0.0
    %182 = vmatpush1.msra.mxu0 0.0
    %183 = vmatprep.subr.mxu0 0.0
    %184 = vmatpush1.msra.mxu0 0.0
    %185 = vmatprep.subr.mxu0 0.0
    %186 = vmatpush1.msra.mxu0 0.0
    %187 = vmatprep.subr.mxu0 0.0
    %188 = vmatpush1.msra.mxu0 0.0
    %189 = vmatprep.subr.mxu0 0.0
    %190 = vmatpush1.msra.mxu0 0.0
    %191 = vmatprep.subr.mxu0 0.0
    %192 = vmatpush1.msra.mxu0 0.0
    %193 = vmatprep.subr.mxu0 0.0
    %194 = vmatpush1.msra.mxu0 0.0
    %195 = vmatprep.subr.mxu0 0.0
    %196 = vmatpush1.msra.mxu0 0.0
    %197 = vmatprep.subr.mxu0 0.0
    %198 = vmatpush1.msra.mxu0 0.0
    %199 = vmatprep.subr.mxu0 0.0
    %200 = vmatpush1.msra.mxu0 0.0
    %201 = vmatprep.subr.mxu0 0.0
    %202 = vmatpush1.msra.mxu0 0.0
    %203 = vmatprep.subr.mxu0 0.0
    %204 = vmatpush1.msra.mxu0 0.0
    %205 = vmatprep.subr.mxu0 0.0
    %206 = vmatpush1.msra.mxu0 0.0
    %207 = vmatprep.subr.mxu0 0.0
    %208 = vmatpush1.msra.mxu0 0.0
    %209 = vmatprep.subr.mxu0 0.0
    %210 = vmatpush1.msra.mxu0 0.0
    %211 = vmatprep.subr.mxu0 0.0
    %212 = vmatpush1.msra.mxu0 0.0
    %213 = vmatprep.subr.mxu0 0.0
    %214 = vmatpush1.msra.mxu0 0.0
    %215 = vmatprep.subr.mxu0 0.0
    %216 = vmatpush1.msra.mxu0 0.0
    %217 = vmatprep.subr.mxu0 0.0
    %218 = vmatpush1.msra.mxu0 0.0
    %219 = vmatprep.subr.mxu0 0.0
    %220 = vmatpush1.msra.mxu0 0.0
    %221 = vmatprep.subr.mxu0 0.0
    %222 = vmatpush1.msra.mxu0 0.0
    %223 = vmatprep.subr.mxu0 0.0
    %224 = vmatpush1.msra.mxu0 0.0
    %225 = vmatprep.subr.mxu0 0.0
    %226 = vmatpush1.msra.mxu0 0.0
    %227 = vmatprep.subr.mxu0 0.0
    %228 = vmatpush1.msra.mxu0 0.0
    %229 = vmatprep.subr.mxu0 0.0
    %230 = vmatpush1.msra.mxu0 0.0
    %231 = vmatprep.subr.mxu0 0.0
    %232 = vmatpush1.msra.mxu0 0.0
    %233 = vmatprep.subr.mxu0 0.0
    %234 = vmatpush1.msra.mxu0 0.0
    %235 = vmatprep.subr.mxu0 0.0
    %236 = vmatpush1.msra.mxu0 0.0
    %237 = vmatprep.mubr.f32.mxu0 0.0
    %238 = vmatmul.mubr.f32.gmra.mrb[0].mxu0 %v101
    %v239 = vpop.f32.mrb[0].mxu0
    %v240 = vadd.f32 %v97, %v239
    %v241 = vpop.f32.mrb[0].mxu0
    %242 = vdwg.mxu0
    %243 = vmatprep.subr.mxu0 0.0
    %244 = vmatpush1.msra.mxu0 %v79
    %245 = vmatprep.subr.mxu0 0.0
    %246 = vmatpush1.msra.mxu0 %v80
    %247 = vmatprep.subr.mxu0 0.0
    %248 = vmatpush1.msra.mxu0 0.0
    %249 = vmatprep.subr.mxu0 0.0
    %250 = vmatpush1.msra.mxu0 0.0
    %251 = vmatprep.subr.mxu0 0.0
    %252 = vmatpush1.msra.mxu0 0.0
    %253 = vmatprep.subr.mxu0 0.0
    %254 = vmatpush1.msra.mxu0 0.0
    %255 = vmatprep.subr.mxu0 0.0
    %256 = vmatpush1.msra.mxu0 0.0
    %257 = vmatprep.subr.mxu0 0.0
    %258 = vmatpush1.msra.mxu0 0.0
    %259 = vmatprep.subr.mxu0 0.0
    %260 = vmatpush1.msra.mxu0 0.0
    %261 = vmatprep.subr.mxu0 0.0
    %262 = vmatpush1.msra.mxu0 0.0
    %263 = vmatprep.subr.mxu0 0.0
    %264 = vmatpush1.msra.mxu0 0.0
    %265 = vmatprep.subr.mxu0 0.0
    %266 = vmatpush1.msra.mxu0 0.0
    %267 = vmatprep.subr.mxu0 0.0
    %268 = vmatpush1.msra.mxu0 0.0
    %269 = vmatprep.subr.mxu0 0.0
    %270 = vmatpush1.msra.mxu0 0.0
    %271 = vmatprep.subr.mxu0 0.0
    %272 = vmatpush1.msra.mxu0 0.0
    %273 = vmatprep.subr.mxu0 0.0
    %274 = vmatpush1.msra.mxu0 0.0
    %275 = vmatprep.subr.mxu0 0.0
    %276 = vmatpush1.msra.mxu0 0.0
    %277 = vmatprep.subr.mxu0 0.0
    %278 = vmatpush1.msra.mxu0 0.0
    %279 = vmatprep.subr.mxu0 0.0
    %280 = vmatpush1.msra.mxu0 0.0
    %281 = vmatprep.subr.mxu0 0.0
    %282 = vmatpush1.msra.mxu0 0.0
    %283 = vmatprep.subr.mxu0 0.0
    %284 = vmatpush1.msra.mxu0 0.0
    %285 = vmatprep.subr.mxu0 0.0
    %286 = vmatpush1.msra.mxu0 0.0
    %287 = vmatprep.subr.mxu0 0.0
    %288 = vmatpush1.msra.mxu0 0.0
    %289 = vmatprep.subr.mxu0 0.0
    %290 = vmatpush1.msra.mxu0 0.0
    %291 = vmatprep.subr.mxu0 0.0
    %292 = vmatpush1.msra.mxu0 0.0
    %293 = vmatprep.subr.mxu0 0.0
    %294 = vmatpush1.msra.mxu0 0.0
    %295 = vmatprep.subr.mxu0 0.0
    %296 = vmatpush1.msra.mxu0 0.0
    %297 = vmatprep.subr.mxu0 0.0
    %298 = vmatpush1.msra.mxu0 0.0
    %299 = vmatprep.subr.mxu0 0.0
    %300 = vmatpush1.msra.mxu0 0.0
    %301 = vmatprep.subr.mxu0 0.0
    %302 = vmatpush1.msra.mxu0 0.0
    %303 = vmatprep.subr.mxu0 0.0
    %304 = vmatpush1.msra.mxu0 0.0
    %305 = vmatprep.subr.mxu0 0.0
    %306 = vmatpush1.msra.mxu0 0.0
    %307 = vmatprep.mubr.f32.mxu0 0.0
    %308 = vmatmul.mubr.f32.gmra.mrb[0].mxu0 %v101
    %v309 = vpop.f32.mrb[0].mxu0
    %v310 = vadd.f32 %v97, %v309
    %v311 = vpop.f32.mrb[0].mxu0
    %312 = vdwg.mxu0
    %313 = vmatprep.subr.mxu0 0.0
    %314 = vmatpush1.msra.mxu0 %v81
    %315 = vmatprep.subr.mxu0 0.0
    %316 = vmatpush1.msra.mxu0 %v82
    %317 = vmatprep.subr.mxu0 0.0
    %318 = vmatpush1.msra.mxu0 0.0
    %319 = vmatprep.subr.mxu0 0.0
    %320 = vmatpush1.msra.mxu0 0.0
    %321 = vmatprep.subr.mxu0 0.0
    %322 = vmatpush1.msra.mxu0 0.0
    %323 = vmatprep.subr.mxu0 0.0
    %324 = vmatpush1.msra.mxu0 0.0
    %325 = vmatprep.subr.mxu0 0.0
    %326 = vmatpush1.msra.mxu0 0.0
    %327 = vmatprep.subr.mxu0 0.0
    %328 = vmatpush1.msra.mxu0 0.0
    %329 = vmatprep.subr.mxu0 0.0
    %330 = vmatpush1.msra.mxu0 0.0
    %331 = vmatprep.subr.mxu0 0.0
    %332 = vmatpush1.msra.mxu0 0.0
    %333 = vmatprep.subr.mxu0 0.0
    %334 = vmatpush1.msra.mxu0 0.0
    %335 = vmatprep.subr.mxu0 0.0
    %336 = vmatpush1.msra.mxu0 0.0
    %337 = vmatprep.subr.mxu0 0.0
    %338 = vmatpush1.msra.mxu0 0.0
    %339 = vmatprep.subr.mxu0 0.0
    %340 = vmatpush1.msra.mxu0 0.0
    %341 = vmatprep.subr.mxu0 0.0
    %342 = vmatpush1.msra.mxu0 0.0
    %343 = vmatprep.subr.mxu0 0.0
    %344 = vmatpush1.msra.mxu0 0.0
    %345 = vmatprep.subr.mxu0 0.0
    %346 = vmatpush1.msra.mxu0 0.0
    %347 = vmatprep.subr.mxu0 0.0
    %348 = vmatpush1.msra.mxu0 0.0
    %349 = vmatprep.subr.mxu0 0.0
    %350 = vmatpush1.msra.mxu0 0.0
    %351 = vmatprep.subr.mxu0 0.0
    %352 = vmatpush1.msra.mxu0 0.0
    %353 = vmatprep.subr.mxu0 0.0
    %354 = vmatpush1.msra.mxu0 0.0
    %355 = vmatprep.subr.mxu0 0.0
    %356 = vmatpush1.msra.mxu0 0.0
    %357 = vmatprep.subr.mxu0 0.0
    %358 = vmatpush1.msra.mxu0 0.0
    %359 = vmatprep.subr.mxu0 0.0
    %360 = vmatpush1.msra.mxu0 0.0
    %361 = vmatprep.subr.mxu0 0.0
    %362 = vmatpush1.msra.mxu0 0.0
    %363 = vmatprep.subr.mxu0 0.0
    %364 = vmatpush1.msra.mxu0 0.0
    %365 = vmatprep.subr.mxu0 0.0
    %366 = vmatpush1.msra.mxu0 0.0
    %367 = vmatprep.subr.mxu0 0.0
    %368 = vmatpush1.msra.mxu0 0.0
    %369 = vmatprep.subr.mxu0 0.0
    %370 = vmatpush1.msra.mxu0 0.0
    %371 = vmatprep.subr.mxu0 0.0
    %372 = vmatpush1.msra.mxu0 0.0
    %373 = vmatprep.subr.mxu0 0.0
    %374 = vmatpush1.msra.mxu0 0.0
    %375 = vmatprep.subr.mxu0 0.0
    %376 = vmatpush1.msra.mxu0 0.0
    %377 = vmatprep.mubr.f32.mxu0 0.0
    %378 = vmatmul.mubr.f32.gmra.mrb[0].mxu0 %v101
    %v379 = vpop.f32.mrb[0].mxu0
    %v380 = vadd.f32 %v97, %v379
    %v381 = vpop.f32.mrb[0].mxu0
    %382 = vdwg.mxu0
    %383 = vmatprep.subr.mxu0 0.0
    %384 = vmatpush1.msra.mxu0 %v83
    %385 = vmatprep.subr.mxu0 0.0
    %386 = vmatpush1.msra.mxu0 %v84
    %387 = vmatprep.subr.mxu0 0.0
    %388 = vmatpush1.msra.mxu0 0.0
    %389 = vmatprep.subr.mxu0 0.0
    %390 = vmatpush1.msra.mxu0 0.0
    %391 = vmatprep.subr.mxu0 0.0
    %392 = vmatpush1.msra.mxu0 0.0
    %393 = vmatprep.subr.mxu0 0.0
    %394 = vmatpush1.msra.mxu0 0.0
    %395 = vmatprep.subr.mxu0 0.0
    %396 = vmatpush1.msra.mxu0 0.0
    %397 = vmatprep.subr.mxu0 0.0
    %398 = vmatpush1.msra.mxu0 0.0
    %399 = vmatprep.subr.mxu0 0.0
    %400 = vmatpush1.msra.mxu0 0.0
    %401 = vmatprep.subr.mxu0 0.0
    %402 = vmatpush1.msra.mxu0 0.0
    %403 = vmatprep.subr.mxu0 0.0
    %404 = vmatpush1.msra.mxu0 0.0
    %405 = vmatprep.subr.mxu0 0.0
    %406 = vmatpush1.msra.mxu0 0.0
    %407 = vmatprep.subr.mxu0 0.0
    %408 = vmatpush1.msra.mxu0 0.0
    %409 = vmatprep.subr.mxu0 0.0
    %410 = vmatpush1.msra.mxu0 0.0
    %411 = vmatprep.subr.mxu0 0.0
    %412 = vmatpush1.msra.mxu0 0.0
    %413 = vmatprep.subr.mxu0 0.0
    %414 = vmatpush1.msra.mxu0 0.0
    %415 = vmatprep.subr.mxu0 0.0
    %416 = vmatpush1.msra.mxu0 0.0
    %417 = vmatprep.subr.mxu0 0.0
    %418 = vmatpush1.msra.mxu0 0.0
    %419 = vmatprep.subr.mxu0 0.0
    %420 = vmatpush1.msra.mxu0 0.0
    %421 = vmatprep.subr.mxu0 0.0
    %422 = vmatpush1.msra.mxu0 0.0
    %423 = vmatprep.subr.mxu0 0.0
    %424 = vmatpush1.msra.mxu0 0.0
    %425 = vmatprep.subr.mxu0 0.0
    %426 = vmatpush1.msra.mxu0 0.0
    %427 = vmatprep.subr.mxu0 0.0
    %428 = vmatpush1.msra.mxu0 0.0
    %429 = vmatprep.subr.mxu0 0.0
    %430 = vmatpush1.msra.mxu0 0.0
    %431 = vmatprep.subr.mxu0 0.0
    %432 = vmatpush1.msra.mxu0 0.0
    %433 = vmatprep.subr.mxu0 0.0
    %434 = vmatpush1.msra.mxu0 0.0
    %435 = vmatprep.subr.mxu0 0.0
    %436 = vmatpush1.msra.mxu0 0.0
    %437 = vmatprep.subr.mxu0 0.0
    %438 = vmatpush1.msra.mxu0 0.0
    %439 = vmatprep.subr.mxu0 0.0
    %440 = vmatpush1.msra.mxu0 0.0
    %441 = vmatprep.subr.mxu0 0.0
    %442 = vmatpush1.msra.mxu0 0.0
    %443 = vmatprep.subr.mxu0 0.0
    %444 = vmatpush1.msra.mxu0 0.0
    %445 = vmatprep.subr.mxu0 0.0
    %446 = vmatpush1.msra.mxu0 0.0
    %447 = vmatprep.mubr.f32.mxu0 0.0
    %448 = vmatmul.mubr.f32.gmra.mrb[0].mxu0 %v101
    %v449 = vpop.f32.mrb[0].mxu0
    %v450 = vadd.f32 %v97, %v449
    %v451 = vpop.f32.mrb[0].mxu0
    %452 = vdwg.mxu0
    %453 = vmatprep.subr.mxu0 0.0
    %454 = vmatpush1.msra.mxu0 %v85
    %455 = vmatprep.subr.mxu0 0.0
    %456 = vmatpush1.msra.mxu0 %v86
    %457 = vmatprep.subr.mxu0 0.0
    %458 = vmatpush1.msra.mxu0 0.0
    %459 = vmatprep.subr.mxu0 0.0
    %460 = vmatpush1.msra.mxu0 0.0
    %461 = vmatprep.subr.mxu0 0.0
    %462 = vmatpush1.msra.mxu0 0.0
    %463 = vmatprep.subr.mxu0 0.0
    %464 = vmatpush1.msra.mxu0 0.0
    %465 = vmatprep.subr.mxu0 0.0
    %466 = vmatpush1.msra.mxu0 0.0
    %467 = vmatprep.subr.mxu0 0.0
    %468 = vmatpush1.msra.mxu0 0.0
    %469 = vmatprep.subr.mxu0 0.0
    %470 = vmatpush1.msra.mxu0 0.0
    %471 = vmatprep.subr.mxu0 0.0
    %472 = vmatpush1.msra.mxu0 0.0
    %473 = vmatprep.subr.mxu0 0.0
    %474 = vmatpush1.msra.mxu0 0.0
    %475 = vmatprep.subr.mxu0 0.0
    %476 = vmatpush1.msra.mxu0 0.0
    %477 = vmatprep.subr.mxu0 0.0
    %478 = vmatpush1.msra.mxu0 0.0
    %479 = vmatprep.subr.mxu0 0.0
    %480 = vmatpush1.msra.mxu0 0.0
    %481 = vmatprep.subr.mxu0 0.0
    %482 = vmatpush1.msra.mxu0 0.0
    %483 = vmatprep.subr.mxu0 0.0
    %484 = vmatpush1.msra.mxu0 0.0
    %485 = vmatprep.subr.mxu0 0.0
    %486 = vmatpush1.msra.mxu0 0.0
    %487 = vmatprep.subr.mxu0 0.0
    %488 = vmatpush1.msra.mxu0 0.0
    %489 = vmatprep.subr.mxu0 0.0
    %490 = vmatpush1.msra.mxu0 0.0
    %491 = vmatprep.subr.mxu0 0.0
    %492 = vmatpush1.msra.mxu0 0.0
    %493 = vmatprep.subr.mxu0 0.0
    %494 = vmatpush1.msra.mxu0 0.0
    %495 = vmatprep.subr.mxu0 0.0
    %496 = vmatpush1.msra.mxu0 0.0
    %497 = vmatprep.subr.mxu0 0.0
    %498 = vmatpush1.msra.mxu0 0.0
    %499 = vmatprep.subr.mxu0 0.0
    %500 = vmatpush1.msra.mxu0 0.0
    %501 = vmatprep.subr.mxu0 0.0
    %502 = vmatpush1.msra.mxu0 0.0
    %503 = vmatprep.subr.mxu0 0.0
    %504 = vmatpush1.msra.mxu0 0.0
    %505 = vmatprep.subr.mxu0 0.0
    %506 = vmatpush1.msra.mxu0 0.0
    %507 = vmatprep.subr.mxu0 0.0
    %508 = vmatpush1.msra.mxu0 0.0
    %509 = vmatprep.subr.mxu0 0.0
    %510 = vmatpush1.msra.mxu0 0.0
    %511 = vmatprep.subr.mxu0 0.0
    %512 = vmatpush1.msra.mxu0 0.0
    %513 = vmatprep.subr.mxu0 0.0
    %514 = vmatpush1.msra.mxu0 0.0
    %515 = vmatprep.subr.mxu0 0.0
    %516 = vmatpush1.msra.mxu0 0.0
    %517 = vmatprep.mubr.f32.mxu0 0.0
    %518 = vmatmul.mubr.f32.gmra.mrb[0].mxu0 %v101
    %v519 = vpop.f32.mrb[0].mxu0
    %v520 = vadd.f32 %v97, %v519
    %v521 = vpop.f32.mrb[0].mxu0
    %522 = vdwg.mxu0
    %523 = vmatprep.subr.mxu0 0.0
    %524 = vmatpush1.msra.mxu0 %v87
    %525 = vmatprep.subr.mxu0 0.0
    %526 = vmatpush1.msra.mxu0 %v88
    %527 = vmatprep.subr.mxu0 0.0
    %528 = vmatpush1.msra.mxu0 0.0
    %529 = vmatprep.subr.mxu0 0.0
    %530 = vmatpush1.msra.mxu0 0.0
    %531 = vmatprep.subr.mxu0 0.0
    %532 = vmatpush1.msra.mxu0 0.0
    %533 = vmatprep.subr.mxu0 0.0
    %534 = vmatpush1.msra.mxu0 0.0
    %535 = vmatprep.subr.mxu0 0.0
    %536 = vmatpush1.msra.mxu0 0.0
    %537 = vmatprep.subr.mxu0 0.0
    %538 = vmatpush1.msra.mxu0 0.0
    %539 = vmatprep.subr.mxu0 0.0
    %540 = vmatpush1.msra.mxu0 0.0
    %541 = vmatprep.subr.mxu0 0.0
    %542 = vmatpush1.msra.mxu0 0.0
    %543 = vmatprep.subr.mxu0 0.0
    %544 = vmatpush1.msra.mxu0 0.0
    %545 = vmatprep.subr.mxu0 0.0
    %546 = vmatpush1.msra.mxu0 0.0
    %547 = vmatprep.subr.mxu0 0.0
    %548 = vmatpush1.msra.mxu0 0.0
    %549 = vmatprep.subr.mxu0 0.0
    %550 = vmatpush1.msra.mxu0 0.0
    %551 = vmatprep.subr.mxu0 0.0
    %552 = vmatpush1.msra.mxu0 0.0
    %553 = vmatprep.subr.mxu0 0.0
    %554 = vmatpush1.msra.mxu0 0.0
    %555 = vmatprep.subr.mxu0 0.0
    %556 = vmatpush1.msra.mxu0 0.0
    %557 = vmatprep.subr.mxu0 0.0
    %558 = vmatpush1.msra.mxu0 0.0
    %559 = vmatprep.subr.mxu0 0.0
    %560 = vmatpush1.msra.mxu0 0.0
    %561 = vmatprep.subr.mxu0 0.0
    %562 = vmatpush1.msra.mxu0 0.0
    %563 = vmatprep.subr.mxu0 0.0
    %564 = vmatpush1.msra.mxu0 0.0
    %565 = vmatprep.subr.mxu0 0.0
    %566 = vmatpush1.msra.mxu0 0.0
    %567 = vmatprep.subr.mxu0 0.0
    %568 = vmatpush1.msra.mxu0 0.0
    %569 = vmatprep.subr.mxu0 0.0
    %570 = vmatpush1.msra.mxu0 0.0
    %571 = vmatprep.subr.mxu0 0.0
    %572 = vmatpush1.msra.mxu0 0.0
    %573 = vmatprep.subr.mxu0 0.0
    %574 = vmatpush1.msra.mxu0 0.0
    %575 = vmatprep.subr.mxu0 0.0
    %576 = vmatpush1.msra.mxu0 0.0
    %577 = vmatprep.subr.mxu0 0.0
    %578 = vmatpush1.msra.mxu0 0.0
    %579 = vmatprep.subr.mxu0 0.0
    %580 = vmatpush1.msra.mxu0 0.0
    %581 = vmatprep.subr.mxu0 0.0
    %582 = vmatpush1.msra.mxu0 0.0
    %583 = vmatprep.subr.mxu0 0.0
    %584 = vmatpush1.msra.mxu0 0.0
    %585 = vmatprep.subr.mxu0 0.0
    %586 = vmatpush1.msra.mxu0 0.0
    %587 = vmatprep.mubr.f32.mxu0 0.0
    %588 = vmatmul.mubr.f32.gmra.mrb[0].mxu0 %v101
    %v589 = vpop.f32.mrb[0].mxu0
    %v590 = vadd.f32 %v97, %v589
    %v591 = vpop.f32.mrb[0].mxu0
    %592 = vdwg.mxu0
    %593 = vmatprep.subr.mxu0 0.0
    %594 = vmatpush1.msra.mxu0 %v89
    %595 = vmatprep.subr.mxu0 0.0
    %596 = vmatpush1.msra.mxu0 %v90
    %597 = vmatprep.subr.mxu0 0.0
    %598 = vmatpush1.msra.mxu0 0.0
    %599 = vmatprep.subr.mxu0 0.0
    %600 = vmatpush1.msra.mxu0 0.0
    %601 = vmatprep.subr.mxu0 0.0
    %602 = vmatpush1.msra.mxu0 0.0
    %603 = vmatprep.subr.mxu0 0.0
    %604 = vmatpush1.msra.mxu0 0.0
    %605 = vmatprep.subr.mxu0 0.0
    %606 = vmatpush1.msra.mxu0 0.0
    %607 = vmatprep.subr.mxu0 0.0
    %608 = vmatpush1.msra.mxu0 0.0
    %609 = vmatprep.subr.mxu0 0.0
    %610 = vmatpush1.msra.mxu0 0.0
    %611 = vmatprep.subr.mxu0 0.0
    %612 = vmatpush1.msra.mxu0 0.0
    %613 = vmatprep.subr.mxu0 0.0
    %614 = vmatpush1.msra.mxu0 0.0
    %615 = vmatprep.subr.mxu0 0.0
    %616 = vmatpush1.msra.mxu0 0.0
    %617 = vmatprep.subr.mxu0 0.0
    %618 = vmatpush1.msra.mxu0 0.0
    %619 = vmatprep.subr.mxu0 0.0
    %620 = vmatpush1.msra.mxu0 0.0
    %621 = vmatprep.subr.mxu0 0.0
    %622 = vmatpush1.msra.mxu0 0.0
    %623 = vmatprep.subr.mxu0 0.0
    %624 = vmatpush1.msra.mxu0 0.0
    %625 = vmatprep.subr.mxu0 0.0
    %626 = vmatpush1.msra.mxu0 0.0
    %627 = vmatprep.subr.mxu0 0.0
    %628 = vmatpush1.msra.mxu0 0.0
    %629 = vmatprep.subr.mxu0 0.0
    %630 = vmatpush1.msra.mxu0 0.0
    %631 = vmatprep.subr.mxu0 0.0
    %632 = vmatpush1.msra.mxu0 0.0
    %633 = vmatprep.subr.mxu0 0.0
    %634 = vmatpush1.msra.mxu0 0.0
    %635 = vmatprep.subr.mxu0 0.0
    %636 = vmatpush1.msra.mxu0 0.0
    %637 = vmatprep.subr.mxu0 0.0
    %638 = vmatpush1.msra.mxu0 0.0
    %639 = vmatprep.subr.mxu0 0.0
    %640 = vmatpush1.msra.mxu0 0.0
    %641 = vmatprep.subr.mxu0 0.0
    %642 = vmatpush1.msra.mxu0 0.0
    %643 = vmatprep.subr.mxu0 0.0
    %644 = vmatpush1.msra.mxu0 0.0
    %645 = vmatprep.subr.mxu0 0.0
    %646 = vmatpush1.msra.mxu0 0.0
    %647 = vmatprep.subr.mxu0 0.0
    %648 = vmatpush1.msra.mxu0 0.0
    %649 = vmatprep.subr.mxu0 0.0
    %650 = vmatpush1.msra.mxu0 0.0
    %651 = vmatprep.subr.mxu0 0.0
    %652 = vmatpush1.msra.mxu0 0.0
    %653 = vmatprep.subr.mxu0 0.0
    %654 = vmatpush1.msra.mxu0 0.0
    %655 = vmatprep.subr.mxu0 0.0
    %656 = vmatpush1.msra.mxu0 0.0
    %657 = vmatprep.mubr.f32.mxu0 0.0
    %658 = vmatmul.mubr.f32.gmra.mrb[0].mxu0 %v101
    %v659 = vpop.f32.mrb[0].mxu0
    %v660 = vadd.f32 %v97, %v659
    %v661 = vpop.f32.mrb[0].mxu0
    %662 = vdwg.mxu0
    %v663 = vmax.f32 %v170, 0.0
    %v664 = vmax.f32 %v240, 0.0
    %v665 = vmax.f32 %v310, 0.0
    %v666 = vmax.f32 %v380, 0.0
    %v667 = vmax.f32 %v450, 0.0
    %v668 = vmax.f32 %v520, 0.0
    %v669 = vmax.f32 %v590, 0.0
    %v670 = vmax.f32 %v660, 0.0
    %v671 = vrot.slane %v663, 4
    %v672 = vadd.f32 %v663, %v671
    %v673 = vrot.slane %v672, 2
    %v674 = vadd.f32 %v672, %v673
    %v675 = vrot.slane %v674, 1
    %v676 = vadd.f32 %v674, %v675
    %v677 = vrot.slane %v664, 4
    %v678 = vadd.f32 %v664, %v677
    %v679 = vrot.slane %v678, 2
    %v680 = vadd.f32 %v678, %v679
    %v681 = vrot.slane %v680, 1
    %v682 = vadd.f32 %v680, %v681
    %v683 = vrot.slane %v665, 4
    %v684 = vadd.f32 %v665, %v683
    %v685 = vrot.slane %v684, 2
    %v686 = vadd.f32 %v684, %v685
    %v687 = vrot.slane %v686, 1
    %v688 = vadd.f32 %v686, %v687
    %v689 = vrot.slane %v666, 4
    %v690 = vadd.f32 %v666, %v689
    %v691 = vrot.slane %v690, 2
    %v692 = vadd.f32 %v690, %v691
    %v693 = vrot.slane %v692, 1
    %v694 = vadd.f32 %v692, %v693
    %v695 = vrot.slane %v667, 4
    %v696 = vadd.f32 %v667, %v695
    %v697 = vrot.slane %v696, 2
    %v698 = vadd.f32 %v696, %v697
    %v699 = vrot.slane %v698, 1
    %v700 = vadd.f32 %v698, %v699
    %v701 = vrot.slane %v668, 4
    %v702 = vadd.f32 %v668, %v701
    %v703 = vrot.slane %v702, 2
    %v704 = vadd.f32 %v702, %v703
    %v705 = vrot.slane %v704, 1
    %v706 = vadd.f32 %v704, %v705
    %v707 = vrot.slane %v669, 4
    %v708 = vadd.f32 %v669, %v707
    %v709 = vrot.slane %v708, 2
    %v710 = vadd.f32 %v708, %v709
    %v711 = vrot.slane %v710, 1
    %v712 = vadd.f32 %v710, %v711
    %v713 = vrot.slane %v670, 4
    %v714 = vadd.f32 %v670, %v713
    %v715 = vrot.slane %v714, 2
    %v716 = vadd.f32 %v714, %v715
    %v717 = vrot.slane %v716, 1
    %v718 = vadd.f32 %v716, %v717
    %v719 = vrcp.pop 8.0
    %v720 = vmul.f32 %v676, %v719
    %v721 = vmul.f32 %v682, %v719
    %v722 = vmul.f32 %v688, %v719
    %v723 = vmul.f32 %v694, %v719
    %v724 = vmul.f32 %v700, %v719
    %v725 = vmul.f32 %v706, %v719
    %v726 = vmul.f32 %v712, %v719
    %v727 = vmul.f32 %v718, %v719
    %v728 = vsub.f32 %v663, %v720
    %v729 = vsub.f32 %v664, %v721
    %v730 = vsub.f32 %v665, %v722
    %v731 = vsub.f32 %v666, %v723
    %v732 = vsub.f32 %v667, %v724
    %v733 = vsub.f32 %v668, %v725
    %v734 = vsub.f32 %v669, %v726
    %v735 = vsub.f32 %v670, %v727
    %v736 = vmul.f32 %v728, %v728
    %v737 = vmul.f32 %v729, %v729
    %v738 = vmul.f32 %v730, %v730
    %v739 = vmul.f32 %v731, %v731
    %v740 = vmul.f32 %v732, %v732
    %v741 = vmul.f32 %v733, %v733
    %v742 = vmul.f32 %v734, %v734
    %v743 = vmul.f32 %v735, %v735
    %v744 = vrot.slane %v736, 4
    %v745 = vadd.f32 %v736, %v744
    %v746 = vrot.slane %v745, 2
    %v747 = vadd.f32 %v745, %v746
    %v748 = vrot.slane %v747, 1
    %v749 = vadd.f32 %v747, %v748
    %v750 = vrot.slane %v737, 4
    %v751 = vadd.f32 %v737, %v750
    %v752 = vrot.slane %v751, 2
    %v753 = vadd.f32 %v751, %v752
    %v754 = vrot.slane %v753, 1
    %v755 = vadd.f32 %v753, %v754
    %v756 = vrot.slane %v738, 4
    %v757 = vadd.f32 %v738, %v756
    %v758 = vrot.slane %v757, 2
    %v759 = vadd.f32 %v757, %v758
    %v760 = vrot.slane %v759, 1
    %v761 = vadd.f32 %v759, %v760
    %v762 = vrot.slane %v739, 4
    %v763 = vadd.f32 %v739, %v762
    %v764 = vrot.slane %v763, 2
    %v765 = vadd.f32 %v763, %v764
    %v766 = vrot.slane %v765, 1
    %v767 = vadd.f32 %v765, %v766
    %v768 = vrot.slane %v740, 4
    %v769 = vadd.f32 %v740, %v768
    %v770 = vrot.slane %v769, 2
    %v771 = vadd.f32 %v769, %v770
    %v772 = vrot.slane %v771, 1
    %v773 = vadd.f32 %v771, %v772
    %v774 = vrot.slane %v741, 4
    %v775 = vadd.f32 %v741, %v774
    %v776 = vrot.slane %v775, 2
    %v777 = vadd.f32 %v775, %v776
    %v778 = vrot.slane %v777, 1
    %v779 = vadd.f32 %v777, %v778
    %v780 = vrot.slane %v742, 4
    %v781 = vadd.f32 %v742, %v780
    %v782 = vrot.slane %v781, 2
    %v783 = vadd.f32 %v781, %v782
    %v784 = vrot.slane %v783, 1
    %v785 = vadd.f32 %v783, %v784
    %v786 = vrot.slane %v743, 4
    %v787 = vadd.f32 %v743, %v786
    %v788 = vrot.slane %v787, 2
    %v789 = vadd.f32 %v787, %v788
    %v790 = vrot.slane %v789, 1
    %v791 = vadd.f32 %v789, %v790
    %v792 = vmul.f32 %v749, %v719
    %v793 = vmul.f32 %v755, %v719
    %v794 = vmul.f32 %v761, %v719
    %v795 = vmul.f32 %v767, %v719
    %v796 = vmul.f32 %v773, %v719
    %v797 = vmul.f32 %v779, %v719
    %v798 = vmul.f32 %v785, %v719
    %v799 = vmul.f32 %v791, %v719
    %v800 = vadd.f32 %v792, 1e-05
    %v801 = vadd.f32 %v793, 1e-05
    %v802 = vadd.f32 %v794, 1e-05
    %v803 = vadd.f32 %v795, 1e-05
    %v804 = vadd.f32 %v796, 1e-05
    %v805 = vadd.f32 %v797, 1e-05
    %v806 = vadd.f32 %v798, 1e-05
    %v807 = vadd.f32 %v799, 1e-05
    %v808 = vrsqrt.pop %v800
    %v809 = vrsqrt.pop %v801
    %v810 = vrsqrt.pop %v802
    %v811 = vrsqrt.pop %v803
    %v812 = vrsqrt.pop %v804
    %v813 = vrsqrt.pop %v805
    %v814 = vrsqrt.pop %v806
    %v815 = vrsqrt.pop %v807
    %816 = vset.pattern.permute.xlu0 1
    %817 = vperm.xlu0 %816, %v91
    %v818 = vpop.permute.xlu0 %817
    %v820 = vmul.f32 %v818, %v808
    %v821 = vmul.f32 %v818, %v809
    %v822 = vmul.f32 %v818, %v810
    %v823 = vmul.f32 %v818, %v811
    %v824 = vmul.f32 %v818, %v812
    %v825 = vmul.f32 %v818, %v813
    %v826 = vmul.f32 %v818, %v814
    %v827 = vmul.f32 %v818, %v815
    %v828 = vmul.f32 %v728, %v820
    %v829 = vmul.f32 %v729, %v821
    %v830 = vmul.f32 %v730, %v822
    %v831 = vmul.f32 %v731, %v823
    %v832 = vmul.f32 %v732, %v824
    %v833 = vmul.f32 %v733, %v825
    %v834 = vmul.f32 %v734, %v826
    %v835 = vmul.f32 %v735, %v827
    %836 = vset.pattern.permute.xlu0 2
    %837 = vperm.xlu0 %836, %v91
    %v838 = vpop.permute.xlu0 %837
    %v840 = vadd.f32 %v828, %v838
    %v841 = vadd.f32 %v829, %v838
    %v842 = vadd.f32 %v830, %v838
    %v843 = vadd.f32 %v831, %v838
    %v844 = vadd.f32 %v832, %v838
    %v845 = vadd.f32 %v833, %v838
    %v846 = vadd.f32 %v834, %v838
    %v847 = vadd.f32 %v835, %v838
    %v848 = vld [vmem:[#allocation7] sm:$0xff]
    %849 = vset.pattern.permute.xlu0 3
    %850 = vperm.xlu0 %849, %v91
    %v851 = vpop.permute.xlu0 %850
    %vm853 = vcmask 64512
    %v855 = vsel %vm853, %v848, 0
    %857 = vmatprep.subr.mxu0 0.0
    %858 = vmatpush1.msra.mxu0 %v840
    %859 = vmatprep.subr.mxu0 0.0
    %860 = vmatpush1.msra.mxu0 0.0
    %861 = vmatprep.subr.mxu0 0.0
    %862 = vmatpush1.msra.mxu0 0.0
    %863 = vmatprep.subr.mxu0 0.0
    %864 = vmatpush1.msra.mxu0 0.0
    %865 = vmatprep.subr.mxu0 0.0
    %866 = vmatpush1.msra.mxu0 0.0
    %867 = vmatprep.subr.mxu0 0.0
    %868 = vmatpush1.msra.mxu0 0.0
    %869 = vmatprep.subr.mxu0 0.0
    %870 = vmatpush1.msra.mxu0 0.0
    %871 = vmatprep.subr.mxu0 0.0
    %872 = vmatpush1.msra.mxu0 0.0
    %873 = vmatprep.subr.mxu0 0.0
    %874 = vmatpush1.msra.mxu0 0.0
    %875 = vmatprep.subr.mxu0 0.0
    %876 = vmatpush1.msra.mxu0 0.0
    %877 = vmatprep.subr.mxu0 0.0
    %878 = vmatpush1.msra.mxu0 0.0
    %879 = vmatprep.subr.mxu0 0.0
    %880 = vmatpush1.msra.mxu0 0.0
    %881 = vmatprep.subr.mxu0 0.0
    %882 = vmatpush1.msra.mxu0 0.0
    %883 = vmatprep.subr.mxu0 0.0
    %884 = vmatpush1.msra.mxu0 0.0
    %885 = vmatprep.subr.mxu0 0.0
    %886 = vmatpush1.msra.mxu0 0.0
    %887 = vmatprep.subr.mxu0 0.0
    %888 = vmatpush1.msra.mxu0 0.0
    %889 = vmatprep.subr.mxu0 0.0
    %890 = vmatpush1.msra.mxu0 0.0
    %891 = vmatprep.subr.mxu0 0.0
    %892 = vmatpush1.msra.mxu0 0.0
    %893 = vmatprep.subr.mxu0 0.0
    %894 = vmatpush1.msra.mxu0 0.0
    %895 = vmatprep.subr.mxu0 0.0
    %896 = vmatpush1.msra.mxu0 0.0
    %897 = vmatprep.subr.mxu0 0.0
    %898 = vmatpush1.msra.mxu0 0.0
    %899 = vmatprep.subr.mxu0 0.0
    %900 = vmatpush1.msra.mxu0 0.0
    %901 = vmatprep.subr.mxu0 0.0
    %902 = vmatpush1.msra.mxu0 0.0
    %903 = vmatprep.subr.mxu0 0.0
    %904 = vmatpush1.msra.mxu0 0.0
    %905 = vmatprep.subr.mxu0 0.0
    %906 = vmatpush1.msra.mxu0 0.0
    %907 = vmatprep.subr.mxu0 0.0
    %908 = vmatpush1.msra.mxu0 0.0
    %909 = vmatprep.subr.mxu0 0.0
    %910 = vmatpush1.msra.mxu0 0.0
    %911 = vmatprep.subr.mxu0 0.0
    %912 = vmatpush1.msra.mxu0 0.0
    %913 = vmatprep.subr.mxu0 0.0
    %914 = vmatpush1.msra.mxu0 0.0
    %915 = vmatprep.subr.mxu0 0.0
    %916 = vmatpush1.msra.mxu0 0.0
    %917 = vmatprep.subr.mxu0 0.0
    %918 = vmatpush1.msra.mxu0 0.0
    %919 = vmatprep.subr.mxu0 0.0
    %920 = vmatpush1.msra.mxu0 0.0
    %921 = vmatprep.mubr.f32.mxu0 0.0
    %922 = vmatmul.mubr.f32.gmra.mrb[0].mxu0 %v855
    %v923 = vpop.f32.mrb[0].mxu0
    %v924 = vadd.f32 %v851, %v923
    %v925 = vpop.f32.mrb[0].mxu0
    %926 = vdwg.mxu0
    %927 = vmatprep.subr.mxu0 0.0
    %928 = vmatpush1.msra.mxu0 %v841
    %929 = vmatprep.subr.mxu0 0.0
    %930 = vmatpush1.msra.mxu0 0.0
    %931 = vmatprep.subr.mxu0 0.0
    %932 = vmatpush1.msra.mxu0 0.0
    %933 = vmatprep.subr.mxu0 0.0
    %934 = vmatpush1.msra.mxu0 0.0
    %935 = vmatprep.subr.mxu0 0.0
    %936 = vmatpush1.msra.mxu0 0.0
    %937 = vmatprep.subr.mxu0 0.0
    %938 = vmatpush1.msra.mxu0 0.0
    %939 = vmatprep.subr.mxu0 0.0
    %940 = vmatpush1.msra.mxu0 0.0
    %941 = vmatprep.subr.mxu0 0.0
    %942 = vmatpush1.msra.mxu0 0.0
    %943 = vmatprep.subr.mxu0 0.0
    %944 = vmatpush1.msra.mxu0 0.0
    %945 = vmatprep.subr.mxu0 0.0
    %946 = vmatpush1.msra.mxu0 0.0
    %947 = vmatprep.subr.mxu0 0.0
    %948 = vmatpush1.msra.mxu0 0.0
    %949 = vmatprep.subr.mxu0 0.0
    %950 = vmatpush1.msra.mxu0 0.0
    %951 = vmatprep.subr.mxu0 0.0
    %952 = vmatpush1.msra.mxu0 0.0
    %953 = vmatprep.subr.mxu0 0.0
    %954 = vmatpush1.msra.mxu0 0.0
    %955 = vmatprep.subr.mxu0 0.0
    %956 = vmatpush1.msra.mxu0 0.0
    %957 = vmatprep.subr.mxu0 0.0
    %958 = vmatpush1.msra.mxu0 0.0
    %959 = vmatprep.subr.mxu0 0.0
    %960 = vmatpush1.msra.mxu0 0.0
    %961 = vmatprep.subr.mxu0 0.0
    %962 = vmatpush1.msra.mxu0 0.0
    %963 = vmatprep.subr.mxu0 0.0
    %964 = vmatpush1.msra.mxu0 0.0
    %965 = vmatprep.subr.mxu0 0.0
    %966 = vmatpush1.msra.mxu0 0.0
    %967 = vmatprep.subr.mxu0 0.0
    %968 = vmatpush1.msra.mxu0 0.0
    %969 = vmatprep.subr.mxu0 0.0
    %970 = vmatpush1.msra.mxu0 0.0
    %971 = vmatprep.subr.mxu0 0.0
    %972 = vmatpush1.msra.mxu0 0.0
    %973 = vmatprep.subr.mxu0 0.0
    %974 = vmatpush1.msra.mxu0 0.0
    %975 = vmatprep.subr.mxu0 0.0
    %976 = vmatpush1.msra.mxu0 0.0
    %977 = vmatprep.subr.mxu0 0.0
    %978 = vmatpush1.msra.mxu0 0.0
    %979 = vmatprep.subr.mxu0 0.0
    %980 = vmatpush1.msra.mxu0 0.0
    %981 = vmatprep.subr.mxu0 0.0
    %982 = vmatpush1.msra.mxu0 0.0
    %983 = vmatprep.subr.mxu0 0.0
    %984 = vmatpush1.msra.mxu0 0.0
    %985 = vmatprep.subr.mxu0 0.0
    %986 = vmatpush1.msra.mxu0 0.0
    %987 = vmatprep.subr.mxu0 0.0
    %988 = vmatpush1.msra.mxu0 0.0
    %989 = vmatprep.subr.mxu0 0.0
    %990 = vmatpush1.msra.mxu0 0.0
    %991 = vmatprep.mubr.f32.mxu0 0.0
    %992 = vmatmul.mubr.f32.gmra.mrb[0].mxu0 %v855
    %v993 = vpop.f32.mrb[0].mxu0
    %v994 = vadd.f32 %v851, %v993
    %v995 = vpop.f32.mrb[0].mxu0
    %996 = vdwg.mxu0
    %997 = vmatprep.subr.mxu0 0.0
    %998 = vmatpush1.msra.mxu0 %v842
    %999 = vmatprep.subr.mxu0 0.0
    %1000 = vmatpush1.msra.mxu0 0.0
    %1001 = vmatprep.subr.mxu0 0.0
    %1002 = vmatpush1.msra.mxu0 0.0
    %1003 = vmatprep.subr.mxu0 0.0
    %1004 = vmatpush1.msra.mxu0 0.0
    %1005 = vmatprep.subr.mxu0 0.0
    %1006 = vmatpush1.msra.mxu0 0.0
    %1007 = vmatprep.subr.mxu0 0.0
    %1008 = vmatpush1.msra.mxu0 0.0
    %1009 = vmatprep.subr.mxu0 0.0
    %1010 = vmatpush1.msra.mxu0 0.0
    %1011 = vmatprep.subr.mxu0 0.0
    %1012 = vmatpush1.msra.mxu0 0.0
    %1013 = vmatprep.subr.mxu0 0.0
    %1014 = vmatpush1.msra.mxu0 0.0
    %1015 = vmatprep.subr.mxu0 0.0
    %1016 = vmatpush1.msra.mxu0 0.0
    %1017 = vmatprep.subr.mxu0 0.0
    %1018 = vmatpush1.msra.mxu0 0.0
    %1019 = vmatprep.subr.mxu0 0.0
    %1020 = vmatpush1.msra.mxu0 0.0
    %1021 = vmatprep.subr.mxu0 0.0
    %1022 = vmatpush1.msra.mxu0 0.0
    %1023 = vmatprep.subr.mxu0 0.0
    %1024 = vmatpush1.msra.mxu0 0.0
    %1025 = vmatprep.subr.mxu0 0.0
    %1026 = vmatpush1.msra.mxu0 0.0
    %1027 = vmatprep.subr.mxu0 0.0
    %1028 = vmatpush1.msra.mxu0 0.0
    %1029 = vmatprep.subr.mxu0 0.0
    %1030 = vmatpush1.msra.mxu0 0.0
    %1031 = vmatprep.subr.mxu0 0.0
    %1032 = vmatpush1.msra.mxu0 0.0
    %1033 = vmatprep.subr.mxu0 0.0
    %1034 = vmatpush1.msra.mxu0 0.0
    %1035 = vmatprep.subr.mxu0 0.0
    %1036 = vmatpush1.msra.mxu0 0.0
    %1037 = vmatprep.subr.mxu0 0.0
    %1038 = vmatpush1.msra.mxu0 0.0
    %1039 = vmatprep.subr.mxu0 0.0
    %1040 = vmatpush1.msra.mxu0 0.0
    %1041 = vmatprep.subr.mxu0 0.0
    %1042 = vmatpush1.msra.mxu0 0.0
    %1043 = vmatprep.subr.mxu0 0.0
    %1044 = vmatpush1.msra.mxu0 0.0
    %1045 = vmatprep.subr.mxu0 0.0
    %1046 = vmatpush1.msra.mxu0 0.0
    %1047 = vmatprep.subr.mxu0 0.0
    %1048 = vmatpush1.msra.mxu0 0.0
    %1049 = vmatprep.subr.mxu0 0.0
    %1050 = vmatpush1.msra.mxu0 0.0
    %1051 = vmatprep.subr.mxu0 0.0
    %1052 = vmatpush1.msra.mxu0 0.0
    %1053 = vmatprep.subr.mxu0 0.0
    %1054 = vmatpush1.msra.mxu0 0.0
    %1055 = vmatprep.subr.mxu0 0.0
    %1056 = vmatpush1.msra.mxu0 0.0
    %1057 = vmatprep.subr.mxu0 0.0
    %1058 = vmatpush1.msra.mxu0 0.0
    %1059 = vmatprep.subr.mxu0 0.0
    %1060 = vmatpush1.msra.mxu0 0.0
    %1061 = vmatprep.mubr.f32.mxu0 0.0
    %1062 = vmatmul.mubr.f32.gmra.mrb[0].mxu0 %v855
    %v1063 = vpop.f32.mrb[0].mxu0
    %v1064 = vadd.f32 %v851, %v1063
    %v1065 = vpop.f32.mrb[0].mxu0
    %1066 = vdwg.mxu0
    %1067 = vmatprep.subr.mxu0 0.0
    %1068 = vmatpush1.msra.mxu0 %v843
    %1069 = vmatprep.subr.mxu0 0.0
    %1070 = vmatpush1.msra.mxu0 0.0
    %1071 = vmatprep.subr.mxu0 0.0
    %1072 = vmatpush1.msra.mxu0 0.0
    %1073 = vmatprep.subr.mxu0 0.0
    %1074 = vmatpush1.msra.mxu0 0.0
    %1075 = vmatprep.subr.mxu0 0.0
    %1076 = vmatpush1.msra.mxu0 0.0
    %1077 = vmatprep.subr.mxu0 0.0
    %1078 = vmatpush1.msra.mxu0 0.0
    %1079 = vmatprep.subr.mxu0 0.0
    %1080 = vmatpush1.msra.mxu0 0.0
    %1081 = vmatprep.subr.mxu0 0.0
    %1082 = vmatpush1.msra.mxu0 0.0
    %1083 = vmatprep.subr.mxu0 0.0
    %1084 = vmatpush1.msra.mxu0 0.0
    %1085 = vmatprep.subr.mxu0 0.0
    %1086 = vmatpush1.msra.mxu0 0.0
    %1087 = vmatprep.subr.mxu0 0.0
    %1088 = vmatpush1.msra.mxu0 0.0
    %1089 = vmatprep.subr.mxu0 0.0
    %1090 = vmatpush1.msra.mxu0 0.0
    %1091 = vmatprep.subr.mxu0 0.0
    %1092 = vmatpush1.msra.mxu0 0.0
    %1093 = vmatprep.subr.mxu0 0.0
    %1094 = vmatpush1.msra.mxu0 0.0
    %1095 = vmatprep.subr.mxu0 0.0
    %1096 = vmatpush1.msra.mxu0 0.0
    %1097 = vmatprep.subr.mxu0 0.0
    %1098 = vmatpush1.msra.mxu0 0.0
    %1099 = vmatprep.subr.mxu0 0.0
    %1100 = vmatpush1.msra.mxu0 0.0
    %1101 = vmatprep.subr.mxu0 0.0
    %1102 = vmatpush1.msra.mxu0 0.0
    %1103 = vmatprep.subr.mxu0 0.0
    %1104 = vmatpush1.msra.mxu0 0.0
    %1105 = vmatprep.subr.mxu0 0.0
    %1106 = vmatpush1.msra.mxu0 0.0
    %1107 = vmatprep.subr.mxu0 0.0
    %1108 = vmatpush1.msra.mxu0 0.0
    %1109 = vmatprep.subr.mxu0 0.0
    %1110 = vmatpush1.msra.mxu0 0.0
    %1111 = vmatprep.subr.mxu0 0.0
    %1112 = vmatpush1.msra.mxu0 0.0
    %1113 = vmatprep.subr.mxu0 0.0
    %1114 = vmatpush1.msra.mxu0 0.0
    %1115 = vmatprep.subr.mxu0 0.0
    %1116 = vmatpush1.msra.mxu0 0.0
    %1117 = vmatprep.subr.mxu0 0.0
    %1118 = vmatpush1.msra.mxu0 0.0
    %1119 = vmatprep.subr.mxu0 0.0
    %1120 = vmatpush1.msra.mxu0 0.0
    %1121 = vmatprep.subr.mxu0 0.0
    %1122 = vmatpush1.msra.mxu0 0.0
    %1123 = vmatprep.subr.mxu0 0.0
    %1124 = vmatpush1.msra.mxu0 0.0
    %1125 = vmatprep.subr.mxu0 0.0
    %1126 = vmatpush1.msra.mxu0 0.0
    %1127 = vmatprep.subr.mxu0 0.0
    %1128 = vmatpush1.msra.mxu0 0.0
    %1129 = vmatprep.subr.mxu0 0.0
    %1130 = vmatpush1.msra.mxu0 0.0
    %1131 = vmatprep.mubr.f32.mxu0 0.0
    %1132 = vmatmul.mubr.f32.gmra.mrb[0].mxu0 %v855
    %v1133 = vpop.f32.mrb[0].mxu0
    %v1134 = vadd.f32 %v851, %v1133
    %v1135 = vpop.f32.mrb[0].mxu0
    %1136 = vdwg.mxu0
    %1137 = vmatprep.subr.mxu0 0.0
    %1138 = vmatpush1.msra.mxu0 %v844
    %1139 = vmatprep.subr.mxu0 0.0
    %1140 = vmatpush1.msra.mxu0 0.0
    %1141 = vmatprep.subr.mxu0 0.0
    %1142 = vmatpush1.msra.mxu0 0.0
    %1143 = vmatprep.subr.mxu0 0.0
    %1144 = vmatpush1.msra.mxu0 0.0
    %1145 = vmatprep.subr.mxu0 0.0
    %1146 = vmatpush1.msra.mxu0 0.0
    %1147 = vmatprep.subr.mxu0 0.0
    %1148 = vmatpush1.msra.mxu0 0.0
    %1149 = vmatprep.subr.mxu0 0.0
    %1150 = vmatpush1.msra.mxu0 0.0
    %1151 = vmatprep.subr.mxu0 0.0
    %1152 = vmatpush1.msra.mxu0 0.0
    %1153 = vmatprep.subr.mxu0 0.0
    %1154 = vmatpush1.msra.mxu0 0.0
    %1155 = vmatprep.subr.mxu0 0.0
    %1156 = vmatpush1.msra.mxu0 0.0
    %1157 = vmatprep.subr.mxu0 0.0
    %1158 = vmatpush1.msra.mxu0 0.0
    %1159 = vmatprep.subr.mxu0 0.0
    %1160 = vmatpush1.msra.mxu0 0.0
    %1161 = vmatprep.subr.mxu0 0.0
    %1162 = vmatpush1.msra.mxu0 0.0
    %1163 = vmatprep.subr.mxu0 0.0
    %1164 = vmatpush1.msra.mxu0 0.0
    %1165 = vmatprep.subr.mxu0 0.0
    %1166 = vmatpush1.msra.mxu0 0.0
    %1167 = vmatprep.subr.mxu0 0.0
    %1168 = vmatpush1.msra.mxu0 0.0
    %1169 = vmatprep.subr.mxu0 0.0
    %1170 = vmatpush1.msra.mxu0 0.0
    %1171 = vmatprep.subr.mxu0 0.0
    %1172 = vmatpush1.msra.mxu0 0.0
    %1173 = vmatprep.subr.mxu0 0.0
    %1174 = vmatpush1.msra.mxu0 0.0
    %1175 = vmatprep.subr.mxu0 0.0
    %1176 = vmatpush1.msra.mxu0 0.0
    %1177 = vmatprep.subr.mxu0 0.0
    %1178 = vmatpush1.msra.mxu0 0.0
    %1179 = vmatprep.subr.mxu0 0.0
    %1180 = vmatpush1.msra.mxu0 0.0
    %1181 = vmatprep.subr.mxu0 0.0
    %1182 = vmatpush1.msra.mxu0 0.0
    %1183 = vmatprep.subr.mxu0 0.0
    %1184 = vmatpush1.msra.mxu0 0.0
    %1185 = vmatprep.subr.mxu0 0.0
    %1186 = vmatpush1.msra.mxu0 0.0
    %1187 = vmatprep.subr.mxu0 0.0
    %1188 = vmatpush1.msra.mxu0 0.0
    %1189 = vmatprep.subr.mxu0 0.0
    %1190 = vmatpush1.msra.mxu0 0.0
    %1191 = vmatprep.subr.mxu0 0.0
    %1192 = vmatpush1.msra.mxu0 0.0
    %1193 = vmatprep.subr.mxu0 0.0
    %1194 = vmatpush1.msra.mxu0 0.0
    %1195 = vmatprep.subr.mxu0 0.0
    %1196 = vmatpush1.msra.mxu0 0.0
    %1197 = vmatprep.subr.mxu0 0.0
    %1198 = vmatpush1.msra.mxu0 0.0
    %1199 = vmatprep.subr.mxu0 0.0
    %1200 = vmatpush1.msra.mxu0 0.0
    %1201 = vmatprep.mubr.f32.mxu0 0.0
    %1202 = vmatmul.mubr.f32.gmra.mrb[0].mxu0 %v855
    %v1203 = vpop.f32.mrb[0].mxu0
    %v1204 = vadd.f32 %v851, %v1203
    %v1205 = vpop.f32.mrb[0].mxu0
    %1206 = vdwg.mxu0
    %1207 = vmatprep.subr.mxu0 0.0
    %1208 = vmatpush1.msra.mxu0 %v845
    %1209 = vmatprep.subr.mxu0 0.0
    %1210 = vmatpush1.msra.mxu0 0.0
    %1211 = vmatprep.subr.mxu0 0.0
    %1212 = vmatpush1.msra.mxu0 0.0
    %1213 = vmatprep.subr.mxu0 0.0
    %1214 = vmatpush1.msra.mxu0 0.0
    %1215 = vmatprep.subr.mxu0 0.0
    %1216 = vmatpush1.msra.mxu0 0.0
    %1217 = vmatprep.subr.mxu0 0.0
    %1218 = vmatpush1.msra.mxu0 0.0
    %1219 = vmatprep.subr.mxu0 0.0
    %1220 = vmatpush1.msra.mxu0 0.0
    %1221 = vmatprep.subr.mxu0 0.0
    %1222 = vmatpush1.msra.mxu0 0.0
    %1223 = vmatprep.subr.mxu0 0.0
    %1224 = vmatpush1.msra.mxu0 0.0
    %1225 = vmatprep.subr.mxu0 0.0
    %1226 = vmatpush1.msra.mxu0 0.0
    %1227 = vmatprep.subr.mxu0 0.0
    %1228 = vmatpush1.msra.mxu0 0.0
    %1229 = vmatprep.subr.mxu0 0.0
    %1230 = vmatpush1.msra.mxu0 0.0
    %1231 = vmatprep.subr.mxu0 0.0
    %1232 = vmatpush1.msra.mxu0 0.0
    %1233 = vmatprep.subr.mxu0 0.0
    %1234 = vmatpush1.msra.mxu0 0.0
    %1235 = vmatprep.subr.mxu0 0.0
    %1236 = vmatpush1.msra.mxu0 0.0
    %1237 = vmatprep.subr.mxu0 0.0
    %1238 = vmatpush1.msra.mxu0 0.0
    %1239 = vmatprep.subr.mxu0 0.0
    %1240 = vmatpush1.msra.mxu0 0.0
    %1241 = vmatprep.subr.mxu0 0.0
    %1242 = vmatpush1.msra.mxu0 0.0
    %1243 = vmatprep.subr.mxu0 0.0
    %1244 = vmatpush1.msra.mxu0 0.0
    %1245 = vmatprep.subr.mxu0 0.0
    %1246 = vmatpush1.msra.mxu0 0.0
    %1247 = vmatprep.subr.mxu0 0.0
    %1248 = vmatpush1.msra.mxu0 0.0
    %1249 = vmatprep.subr.mxu0 0.0
    %1250 = vmatpush1.msra.mxu0 0.0
    %1251 = vmatprep.subr.mxu0 0.0
    %1252 = vmatpush1.msra.mxu0 0.0
    %1253 = vmatprep.subr.mxu0 0.0
    %1254 = vmatpush1.msra.mxu0 0.0
    %1255 = vmatprep.subr.mxu0 0.0
    %1256 = vmatpush1.msra.mxu0 0.0
    %1257 = vmatprep.subr.mxu0 0.0
    %1258 = vmatpush1.msra.mxu0 0.0
    %1259 = vmatprep.subr.mxu0 0.0
    %1260 = vmatpush1.msra.mxu0 0.0
    %1261 = vmatprep.subr.mxu0 0.0
    %1262 = vmatpush1.msra.mxu0 0.0
    %1263 = vmatprep.subr.mxu0 0.0
    %1264 = vmatpush1.msra.mxu0 0.0
    %1265 = vmatprep.subr.mxu0 0.0
    %1266 = vmatpush1.msra.mxu0 0.0
    %1267 = vmatprep.subr.mxu0 0.0
    %1268 = vmatpush1.msra.mxu0 0.0
    %1269 = vmatprep.subr.mxu0 0.0
    %1270 = vmatpush1.msra.mxu0 0.0
    %1271 = vmatprep.mubr.f32.mxu0 0.0
    %1272 = vmatmul.mubr.f32.gmra.mrb[0].mxu0 %v855
    %v1273 = vpop.f32.mrb[0].mxu0
    %v1274 = vadd.f32 %v851, %v1273
    %v1275 = vpop.f32.mrb[0].mxu0
    %1276 = vdwg.mxu0
    %1277 = vmatprep.subr.mxu0 0.0
    %1278 = vmatpush1.msra.mxu0 %v846
    %1279 = vmatprep.subr.mxu0 0.0
    %1280 = vmatpush1.msra.mxu0 0.0
    %1281 = vmatprep.subr.mxu0 0.0
    %1282 = vmatpush1.msra.mxu0 0.0
    %1283 = vmatprep.subr.mxu0 0.0
    %1284 = vmatpush1.msra.mxu0 0.0
    %1285 = vmatprep.subr.mxu0 0.0
    %1286 = vmatpush1.msra.mxu0 0.0
    %1287 = vmatprep.subr.mxu0 0.0
    %1288 = vmatpush1.msra.mxu0 0.0
    %1289 = vmatprep.subr.mxu0 0.0
    %1290 = vmatpush1.msra.mxu0 0.0
    %1291 = vmatprep.subr.mxu0 0.0
    %1292 = vmatpush1.msra.mxu0 0.0
    %1293 = vmatprep.subr.mxu0 0.0
    %1294 = vmatpush1.msra.mxu0 0.0
    %1295 = vmatprep.subr.mxu0 0.0
    %1296 = vmatpush1.msra.mxu0 0.0
    %1297 = vmatprep.subr.mxu0 0.0
    %1298 = vmatpush1.msra.mxu0 0.0
    %1299 = vmatprep.subr.mxu0 0.0
    %1300 = vmatpush1.msra.mxu0 0.0
    %1301 = vmatprep.subr.mxu0 0.0
    %1302 = vmatpush1.msra.mxu0 0.0
    %1303 = vmatprep.subr.mxu0 0.0
    %1304 = vmatpush1.msra.mxu0 0.0
    %1305 = vmatprep.subr.mxu0 0.0
    %1306 = vmatpush1.msra.mxu0 0.0
    %1307 = vmatprep.subr.mxu0 0.0
    %1308 = vmatpush1.msra.mxu0 0.0
    %1309 = vmatprep.subr.mxu0 0.0
    %1310 = vmatpush1.msra.mxu0 0.0
    %1311 = vmatprep.subr.mxu0 0.0
    %1312 = vmatpush1.msra.mxu0 0.0
    %1313 = vmatprep.subr.mxu0 0.0
    %1314 = vmatpush1.msra.mxu0 0.0
    %1315 = vmatprep.subr.mxu0 0.0
    %1316 = vmatpush1.msra.mxu0 0.0
    %1317 = vmatprep.subr.mxu0 0.0
    %1318 = vmatpush1.msra.mxu0 0.0
    %1319 = vmatprep.subr.mxu0 0.0
    %1320 = vmatpush1.msra.mxu0 0.0
    %1321 = vmatprep.subr.mxu0 0.0
    %1322 = vmatpush1.msra.mxu0 0.0
    %1323 = vmatprep.subr.mxu0 0.0
    %1324 = vmatpush1.msra.mxu0 0.0
    %1325 = vmatprep.subr.mxu0 0.0
    %1326 = vmatpush1.msra.mxu0 0.0
    %1327 = vmatprep.subr.mxu0 0.0
    %1328 = vmatpush1.msra.mxu0 0.0
    %1329 = vmatprep.subr.mxu0 0.0
    %1330 = vmatpush1.msra.mxu0 0.0
    %1331 = vmatprep.subr.mxu0 0.0
    %1332 = vmatpush1.msra.mxu0 0.0
    %1333 = vmatprep.subr.mxu0 0.0
    %1334 = vmatpush1.msra.mxu0 0.0
    %1335 = vmatprep.subr.mxu0 0.0
    %1336 = vmatpush1.msra.mxu0 0.0
    %1337 = vmatprep.subr.mxu0 0.0
    %1338 = vmatpush1.msra.mxu0 0.0
    %1339 = vmatprep.subr.mxu0 0.0
    %1340 = vmatpush1.msra.mxu0 0.0
    %1341 = vmatprep.mubr.f32.mxu0 0.0
    %1342 = vmatmul.mubr.f32.gmra.mrb[0].mxu0 %v855
    %v1343 = vpop.f32.mrb[0].mxu0
    %v1344 = vadd.f32 %v851, %v1343
    %v1345 = vpop.f32.mrb[0].mxu0
    %1346 = vdwg.mxu0
    %1347 = vmatprep.subr.mxu0 0.0
    %1348 = vmatpush1.msra.mxu0 %v847
    %1349 = vmatprep.subr.mxu0 0.0
    %1350 = vmatpush1.msra.mxu0 0.0
    %1351 = vmatprep.subr.mxu0 0.0
    %1352 = vmatpush1.msra.mxu0 0.0
    %1353 = vmatprep.subr.mxu0 0.0
    %1354 = vmatpush1.msra.mxu0 0.0
    %1355 = vmatprep.subr.mxu0 0.0
    %1356 = vmatpush1.msra.mxu0 0.0
    %1357 = vmatprep.subr.mxu0 0.0
    %1358 = vmatpush1.msra.mxu0 0.0
    %1359 = vmatprep.subr.mxu0 0.0
    %1360 = vmatpush1.msra.mxu0 0.0
    %1361 = vmatprep.subr.mxu0 0.0
    %1362 = vmatpush1.msra.mxu0 0.0
    %1363 = vmatprep.subr.mxu0 0.0
    %1364 = vmatpush1.msra.mxu0 0.0
    %1365 = vmatprep.subr.mxu0 0.0
    %1366 = vmatpush1.msra.mxu0 0.0
    %1367 = vmatprep.subr.mxu0 0.0
    %1368 = vmatpush1.msra.mxu0 0.0
    %1369 = vmatprep.subr.mxu0 0.0
    %1370 = vmatpush1.msra.mxu0 0.0
    %1371 = vmatprep.subr.mxu0 0.0
    %1372 = vmatpush1.msra.mxu0 0.0
    %1373 = vmatprep.subr.mxu0 0.0
    %1374 = vmatpush1.msra.mxu0 0.0
    %1375 = vmatprep.subr.mxu0 0.0
    %1376 = vmatpush1.msra.mxu0 0.0
    %1377 = vmatprep.subr.mxu0 0.0
    %1378 = vmatpush1.msra.mxu0 0.0
    %1379 = vmatprep.subr.mxu0 0.0
    %1380 = vmatpush1.msra.mxu0 0.0
    %1381 = vmatprep.subr.mxu0 0.0
    %1382 = vmatpush1.msra.mxu0 0.0
    %1383 = vmatprep.subr.mxu0 0.0
    %1384 = vmatpush1.msra.mxu0 0.0
    %1385 = vmatprep.subr.mxu0 0.0
    %1386 = vmatpush1.msra.mxu0 0.0
    %1387 = vmatprep.subr.mxu0 0.0
    %1388 = vmatpush1.msra.mxu0 0.0
    %1389 = vmatprep.subr.mxu0 0.0
    %1390 = vmatpush1.msra.mxu0 0.0
    %1391 = vmatprep.subr.mxu0 0.0
    %1392 = vmatpush1.msra.mxu0 0.0
    %1393 = vmatprep.subr.mxu0 0.0
    %1394 = vmatpush1.msra.mxu0 0.0
    %1395 = vmatprep.subr.mxu0 0.0
    %1396 = vmatpush1.msra.mxu0 0.0
    %1397 = vmatprep.subr.mxu0 0.0
    %1398 = vmatpush1.msra.mxu0 0.0
    %1399 = vmatprep.subr.mxu0 0.0
    %1400 = vmatpush1.msra.mxu0 0.0
    %1401 = vmatprep.subr.mxu0 0.0
    %1402 = vmatpush1.msra.mxu0 0.0
    %1403 = vmatprep.subr.mxu0 0.0
    %1404 = vmatpush1.msra.mxu0 0.0
    %1405 = vmatprep.subr.mxu0 0.0
    %1406 = vmatpush1.msra.mxu0 0.0
    %1407 = vmatprep.subr.mxu0 0.0
    %1408 = vmatpush1.msra.mxu0 0.0
    %1409 = vmatprep.subr.mxu0 0.0
    %1410 = vmatpush1.msra.mxu0 0.0
    %1411 = vmatprep.mubr.f32.mxu0 0.0
    %1412 = vmatmul.mubr.f32.gmra.mrb[0].mxu0 %v855
    %v1413 = vpop.f32.mrb[0].mxu0
    %v1414 = vadd.f32 %v851, %v1413
    %v1415 = vpop.f32.mrb[0].mxu0
    %1416 = vdwg.mxu0
    %v1417 = vmax.f32 %v924, 0.0
    %v1418 = vmax.f32 %v994, 0.0
    %v1419 = vmax.f32 %v1064, 0.0
    %v1420 = vmax.f32 %v1134, 0.0
    %v1421 = vmax.f32 %v1204, 0.0
    %v1422 = vmax.f32 %v1274, 0.0
    %v1423 = vmax.f32 %v1344, 0.0
    %v1424 = vmax.f32 %v1414, 0.0
    %v1425 = vrot.slane %v1417, 4
    %v1426 = vadd.f32 %v1417, %v1425
    %v1427 = vrot.slane %v1426, 2
    %v1428 = vadd.f32 %v1426, %v1427
    %v1429 = vrot.slane %v1428, 1
    %v1430 = vadd.f32 %v1428, %v1429
    %v1431 = vrot.slane %v1418, 4
    %v1432 = vadd.f32 %v1418, %v1431
    %v1433 = vrot.slane %v1432, 2
    %v1434 = vadd.f32 %v1432, %v1433
    %v1435 = vrot.slane %v1434, 1
    %v1436 = vadd.f32 %v1434, %v1435
    %v1437 = vrot.slane %v1419, 4
    %v1438 = vadd.f32 %v1419, %v1437
    %v1439 = vrot.slane %v1438, 2
    %v1440 = vadd.f32 %v1438, %v1439
    %v1441 = vrot.slane %v1440, 1
    %v1442 = vadd.f32 %v1440, %v1441
    %v1443 = vrot.slane %v1420, 4
    %v1444 = vadd.f32 %v1420, %v1443
    %v1445 = vrot.slane %v1444, 2
    %v1446 = vadd.f32 %v1444, %v1445
    %v1447 = vrot.slane %v1446, 1
    %v1448 = vadd.f32 %v1446, %v1447
    %v1449 = vrot.slane %v1421, 4
    %v1450 = vadd.f32 %v1421, %v1449
    %v1451 = vrot.slane %v1450, 2
    %v1452 = vadd.f32 %v1450, %v1451
    %v1453 = vrot.slane %v1452, 1
    %v1454 = vadd.f32 %v1452, %v1453
    %v1455 = vrot.slane %v1422, 4
    %v1456 = vadd.f32 %v1422, %v1455
    %v1457 = vrot.slane %v1456, 2
    %v1458 = vadd.f32 %v1456, %v1457
    %v1459 = vrot.slane %v1458, 1
    %v1460 = vadd.f32 %v1458, %v1459
    %v1461 = vrot.slane %v1423, 4
    %v1462 = vadd.f32 %v1423, %v1461
    %v1463 = vrot.slane %v1462, 2
    %v1464 = vadd.f32 %v1462, %v1463
    %v1465 = vrot.slane %v1464, 1
    %v1466 = vadd.f32 %v1464, %v1465
    %v1467 = vrot.slane %v1424, 4
    %v1468 = vadd.f32 %v1424, %v1467
    %v1469 = vrot.slane %v1468, 2
    %v1470 = vadd.f32 %v1468, %v1469
    %v1471 = vrot.slane %v1470, 1
    %v1472 = vadd.f32 %v1470, %v1471
    %v1473 = vmul.f32 %v1430, %v719
    %v1474 = vmul.f32 %v1436, %v719
    %v1475 = vmul.f32 %v1442, %v719
    %v1476 = vmul.f32 %v1448, %v719
    %v1477 = vmul.f32 %v1454, %v719
    %v1478 = vmul.f32 %v1460, %v719
    %v1479 = vmul.f32 %v1466, %v719
    %v1480 = vmul.f32 %v1472, %v719
    %v1481 = vsub.f32 %v1417, %v1473
    %v1482 = vsub.f32 %v1418, %v1474
    %v1483 = vsub.f32 %v1419, %v1475
    %v1484 = vsub.f32 %v1420, %v1476
    %v1485 = vsub.f32 %v1421, %v1477
    %v1486 = vsub.f32 %v1422, %v1478
    %v1487 = vsub.f32 %v1423, %v1479
    %v1488 = vsub.f32 %v1424, %v1480
    %v1489 = vmul.f32 %v1481, %v1481
    %v1490 = vmul.f32 %v1482, %v1482
    %v1491 = vmul.f32 %v1483, %v1483
    %v1492 = vmul.f32 %v1484, %v1484
    %v1493 = vmul.f32 %v1485, %v1485
    %v1494 = vmul.f32 %v1486, %v1486
    %v1495 = vmul.f32 %v1487, %v1487
    %v1496 = vmul.f32 %v1488, %v1488
    %v1497 = vrot.slane %v1489, 4
    %v1498 = vadd.f32 %v1489, %v1497
    %v1499 = vrot.slane %v1498, 2
    %v1500 = vadd.f32 %v1498, %v1499
    %v1501 = vrot.slane %v1500, 1
    %v1502 = vadd.f32 %v1500, %v1501
    %v1503 = vrot.slane %v1490, 4
    %v1504 = vadd.f32 %v1490, %v1503
    %v1505 = vrot.slane %v1504, 2
    %v1506 = vadd.f32 %v1504, %v1505
    %v1507 = vrot.slane %v1506, 1
    %v1508 = vadd.f32 %v1506, %v1507
    %v1509 = vrot.slane %v1491, 4
    %v1510 = vadd.f32 %v1491, %v1509
    %v1511 = vrot.slane %v1510, 2
    %v1512 = vadd.f32 %v1510, %v1511
    %v1513 = vrot.slane %v1512, 1
    %v1514 = vadd.f32 %v1512, %v1513
    %v1515 = vrot.slane %v1492, 4
    %v1516 = vadd.f32 %v1492, %v1515
    %v1517 = vrot.slane %v1516, 2
    %v1518 = vadd.f32 %v1516, %v1517
    %v1519 = vrot.slane %v1518, 1
    %v1520 = vadd.f32 %v1518, %v1519
    %v1521 = vrot.slane %v1493, 4
    %v1522 = vadd.f32 %v1493, %v1521
    %v1523 = vrot.slane %v1522, 2
    %v1524 = vadd.f32 %v1522, %v1523
    %v1525 = vrot.slane %v1524, 1
    %v1526 = vadd.f32 %v1524, %v1525
    %v1527 = vrot.slane %v1494, 4
    %v1528 = vadd.f32 %v1494, %v1527
    %v1529 = vrot.slane %v1528, 2
    %v1530 = vadd.f32 %v1528, %v1529
    %v1531 = vrot.slane %v1530, 1
    %v1532 = vadd.f32 %v1530, %v1531
    %v1533 = vrot.slane %v1495, 4
    %v1534 = vadd.f32 %v1495, %v1533
    %v1535 = vrot.slane %v1534, 2
    %v1536 = vadd.f32 %v1534, %v1535
    %v1537 = vrot.slane %v1536, 1
    %v1538 = vadd.f32 %v1536, %v1537
    %v1539 = vrot.slane %v1496, 4
    %v1540 = vadd.f32 %v1496, %v1539
    %v1541 = vrot.slane %v1540, 2
    %v1542 = vadd.f32 %v1540, %v1541
    %v1543 = vrot.slane %v1542, 1
    %v1544 = vadd.f32 %v1542, %v1543
    %v1545 = vmul.f32 %v1502, %v719
    %v1546 = vmul.f32 %v1508, %v719
    %v1547 = vmul.f32 %v1514, %v719
    %v1548 = vmul.f32 %v1520, %v719
    %v1549 = vmul.f32 %v1526, %v719
    %v1550 = vmul.f32 %v1532, %v719
    %v1551 = vmul.f32 %v1538, %v719
    %v1552 = vmul.f32 %v1544, %v719
    %v1553 = vadd.f32 %v1545, 1e-05
    %v1554 = vadd.f32 %v1546, 1e-05
    %v1555 = vadd.f32 %v1547, 1e-05
    %v1556 = vadd.f32 %v1548, 1e-05
    %v1557 = vadd.f32 %v1549, 1e-05
    %v1558 = vadd.f32 %v1550, 1e-05
    %v1559 = vadd.f32 %v1551, 1e-05
    %v1560 = vadd.f32 %v1552, 1e-05
    %v1561 = vrsqrt.pop %v1553
    %v1562 = vrsqrt.pop %v1554
    %v1563 = vrsqrt.pop %v1555
    %v1564 = vrsqrt.pop %v1556
    %v1565 = vrsqrt.pop %v1557
    %v1566 = vrsqrt.pop %v1558
    %v1567 = vrsqrt.pop %v1559
    %v1568 = vrsqrt.pop %v1560
    %1569 = vset.pattern.permute.xlu0 4
    %1570 = vperm.xlu0 %1569, %v91
    %v1571 = vpop.permute.xlu0 %1570
    %v1573 = vmul.f32 %v1571, %v1561
    %v1574 = vmul.f32 %v1571, %v1562
    %v1575 = vmul.f32 %v1571, %v1563
    %v1576 = vmul.f32 %v1571, %v1564
    %v1577 = vmul.f32 %v1571, %v1565
    %v1578 = vmul.f32 %v1571, %v1566
    %v1579 = vmul.f32 %v1571, %v1567
    %v1580 = vmul.f32 %v1571, %v1568
    %v1581 = vmul.f32 %v1481, %v1573
    %v1582 = vmul.f32 %v1482, %v1574
    %v1583 = vmul.f32 %v1483, %v1575
    %v1584 = vmul.f32 %v1484, %v1576
    %v1585 = vmul.f32 %v1485, %v1577
    %v1586 = vmul.f32 %v1486, %v1578
    %v1587 = vmul.f32 %v1487, %v1579
    %v1588 = vmul.f32 %v1488, %v1580
    %1589 = vset.pattern.permute.xlu0 5
    %1590 = vperm.xlu0 %1589, %v91
    %v1591 = vpop.permute.xlu0 %1590
    %v1593 = vadd.f32 %v1581, %v1591
    %v1594 = vadd.f32 %v1582, %v1591
    %v1595 = vadd.f32 %v1583, %v1591
    %v1596 = vadd.f32 %v1584, %v1591
    %v1597 = vadd.f32 %v1585, %v1591
    %v1598 = vadd.f32 %v1586, %v1591
    %v1599 = vadd.f32 %v1587, %v1591
    %v1600 = vadd.f32 %v1588, %v1591
    %v1601 = vld [vmem:[#allocation8] sm:$0xff]
    %v1602 = vld [vmem:[#allocation8 + $0x8] sm:$0xff]
    %v1603 = vld [vmem:[#allocation8 + $0x10] sm:$0xff]
    %v1604 = vld [vmem:[#allocation8 + $0x18] sm:$0xff]
    %v1605 = vld [vmem:[#allocation8 + $0x20] sm:$0xff]
    %v1606 = vld [vmem:[#allocation8 + $0x28] sm:$0xff]
    %v1607 = vld [vmem:[#allocation8 + $0x30] sm:$0xff]
    %v1608 = vld [vmem:[#allocation8 + $0x38] sm:$0xff]
    %v1609 = vld [vmem:[#allocation8 + $0x40] sm:$0xff]
    %v1610 = vld [vmem:[#allocation8 + $0x48] sm:$0xff]
    %v1611 = vld [vmem:[#allocation8 + $0x50] sm:$0xff]
    %v1612 = vld [vmem:[#allocation8 + $0x58] sm:$0xff]
    %v1613 = vld [vmem:[#allocation8 + $0x60] sm:$0xff]
    %v1614 = vld [vmem:[#allocation8 + $0x68] sm:$0xff]
    %v1615 = vld [vmem:[#allocation8 + $0x70] sm:$0xff]
    %v1616 = vld [vmem:[#allocation8 + $0x78] sm:$0xff]
    %v1617 = vlaneseq
    %v1618 = vshrl.u32 %v1617, 7
    %v1619 = vsub.s32 0, %v1618
    %v1620 = vrot.slane %v92, %v1619
    %1621 = vmatprep.subr.mxu0 0.0
    %1622 = vmatpush1.msra.mxu0 %v1601
    %1623 = vmatprep.subr.mxu0 0.0
    %1624 = vmatpush1.msra.mxu0 %v1602
    %1625 = vmatprep.subr.mxu0 0.0
    %1626 = vmatpush1.msra.mxu0 %v1603
    %1627 = vmatprep.subr.mxu0 0.0
    %1628 = vmatpush1.msra.mxu0 %v1604
    %1629 = vmatprep.subr.mxu0 0.0
    %1630 = vmatpush1.msra.mxu0 %v1605
    %1631 = vmatprep.subr.mxu0 0.0
    %1632 = vmatpush1.msra.mxu0 %v1606
    %1633 = vmatprep.subr.mxu0 0.0
    %1634 = vmatpush1.msra.mxu0 %v1607
    %1635 = vmatprep.subr.mxu0 0.0
    %1636 = vmatpush1.msra.mxu0 %v1608
    %1637 = vmatprep.subr.mxu0 0.0
    %1638 = vmatpush1.msra.mxu0 %v1609
    %1639 = vmatprep.subr.mxu0 0.0
    %1640 = vmatpush1.msra.mxu0 %v1610
    %1641 = vmatprep.subr.mxu0 0.0
    %1642 = vmatpush1.msra.mxu0 %v1611
    %1643 = vmatprep.subr.mxu0 0.0
    %1644 = vmatpush1.msra.mxu0 %v1612
    %1645 = vmatprep.subr.mxu0 0.0
    %1646 = vmatpush1.msra.mxu0 %v1613
    %1647 = vmatprep.subr.mxu0 0.0
    %1648 = vmatpush1.msra.mxu0 %v1614
    %1649 = vmatprep.subr.mxu0 0.0
    %1650 = vmatpush1.msra.mxu0 %v1615
    %1651 = vmatprep.subr.mxu0 0.0
    %1652 = vmatpush1.msra.mxu0 %v1616
    %1653 = vmatprep.subr.mxu0 0.0
    %1654 = vmatpush1.msra.mxu0 0.0
    %1655 = vmatprep.subr.mxu0 0.0
    %1656 = vmatpush1.msra.mxu0 0.0
    %1657 = vmatprep.subr.mxu0 0.0
    %1658 = vmatpush1.msra.mxu0 0.0
    %1659 = vmatprep.subr.mxu0 0.0
    %1660 = vmatpush1.msra.mxu0 0.0
    %1661 = vmatprep.subr.mxu0 0.0
    %1662 = vmatpush1.msra.mxu0 0.0
    %1663 = vmatprep.subr.mxu0 0.0
    %1664 = vmatpush1.msra.mxu0 0.0
    %1665 = vmatprep.subr.mxu0 0.0
    %1666 = vmatpush1.msra.mxu0 0.0
    %1667 = vmatprep.subr.mxu0 0.0
    %1668 = vmatpush1.msra.mxu0 0.0
    %1669 = vmatprep.subr.mxu0 0.0
    %1670 = vmatpush1.msra.mxu0 0.0
    %1671 = vmatprep.subr.mxu0 0.0
    %1672 = vmatpush1.msra.mxu0 0.0
    %1673 = vmatprep.subr.mxu0 0.0
    %1674 = vmatpush1.msra.mxu0 0.0
    %1675 = vmatprep.subr.mxu0 0.0
    %1676 = vmatpush1.msra.mxu0 0.0
    %1677 = vmatprep.subr.mxu0 0.0
    %1678 = vmatpush1.msra.mxu0 0.0
    %1679 = vmatprep.subr.mxu0 0.0
    %1680 = vmatpush1.msra.mxu0 0.0
    %1681 = vmatprep.subr.mxu0 0.0
    %1682 = vmatpush1.msra.mxu0 0.0
    %1683 = vmatprep.subr.mxu0 0.0
    %1684 = vmatpush1.msra.mxu0 0.0
    %1685 = vmatprep.mubr.f32.mxu0 0.0
    %1686 = vmatmul.mubr.f32.gmra.mrb[0].mxu0 %v1593
    %v1687 = vpop.f32.mrb[0].mxu0
    %v1688 = vadd.f32 %v1620, %v1687
    %v1689 = vpop.f32.mrb[0].mxu0
    %1690 = vmatprep.mubr.f32.mxu0 0.0
    %1691 = vmatmul.mubr.f32.gmra.mrb[0].mxu0 %v1594
    %v1692 = vpop.f32.mrb[0].mxu0
    %v1693 = vadd.f32 %v1620, %v1692
    %v1694 = vpop.f32.mrb[0].mxu0
    %1695 = vmatprep.mubr.f32.mxu0 0.0
    %1696 = vmatmul.mubr.f32.gmra.mrb[0].mxu0 %v1595
    %v1697 = vpop.f32.mrb[0].mxu0
    %v1698 = vadd.f32 %v1620, %v1697
    %v1699 = vpop.f32.mrb[0].mxu0
    %1700 = vmatprep.mubr.f32.mxu0 0.0
    %1701 = vmatmul.mubr.f32.gmra.mrb[0].mxu0 %v1596
    %v1702 = vpop.f32.mrb[0].mxu0
    %v1703 = vadd.f32 %v1620, %v1702
    %v1704 = vpop.f32.mrb[0].mxu0
    %1705 = vmatprep.mubr.f32.mxu0 0.0
    %1706 = vmatmul.mubr.f32.gmra.mrb[0].mxu0 %v1597
    %v1707 = vpop.f32.mrb[0].mxu0
    %v1708 = vadd.f32 %v1620, %v1707
    %v1709 = vpop.f32.mrb[0].mxu0
    %1710 = vmatprep.mubr.f32.mxu0 0.0
    %1711 = vmatmul.mubr.f32.gmra.mrb[0].mxu0 %v1598
    %v1712 = vpop.f32.mrb[0].mxu0
    %v1713 = vadd.f32 %v1620, %v1712
    %v1714 = vpop.f32.mrb[0].mxu0
    %1715 = vmatprep.mubr.f32.mxu0 0.0
    %1716 = vmatmul.mubr.f32.gmra.mrb[0].mxu0 %v1599
    %v1717 = vpop.f32.mrb[0].mxu0
    %v1718 = vadd.f32 %v1620, %v1717
    %v1719 = vpop.f32.mrb[0].mxu0
    %1720 = vmatprep.mubr.f32.mxu0 0.0
    %1721 = vmatmul.mubr.f32.gmra.mrb[0].mxu0 %v1600
    %v1722 = vpop.f32.mrb[0].mxu0
    %v1723 = vadd.f32 %v1620, %v1722
    %v1724 = vpop.f32.mrb[0].mxu0
    %1725 = vdwg.mxu0
    %v1726 = vmax.f32 %v1688, 0.0
    %v1727 = vmax.f32 %v1693, 0.0
    %v1728 = vmax.f32 %v1698, 0.0
    %v1729 = vmax.f32 %v1703, 0.0
    %v1730 = vmax.f32 %v1708, 0.0
    %v1731 = vmax.f32 %v1713, 0.0
    %v1732 = vmax.f32 %v1718, 0.0
    %v1733 = vmax.f32 %v1723, 0.0
    %1734 = vadd.xlane.f32.xlu0 %v1726
    %v1735 = vpop.xlane.xlu0 %1734
    %1736 = vadd.xlane.f32.xlu0 %v1727
    %v1737 = vpop.xlane.xlu0 %1736
    %1738 = vadd.xlane.f32.xlu0 %v1728
    %v1739 = vpop.xlane.xlu0 %1738
    %1740 = vadd.xlane.f32.xlu0 %v1729
    %v1741 = vpop.xlane.xlu0 %1740
    %1742 = vadd.xlane.f32.xlu0 %v1730
    %v1743 = vpop.xlane.xlu0 %1742
    %1744 = vadd.xlane.f32.xlu0 %v1731
    %v1745 = vpop.xlane.xlu0 %1744
    %1746 = vadd.xlane.f32.xlu0 %v1732
    %v1747 = vpop.xlane.xlu0 %1746
    %1748 = vadd.xlane.f32.xlu0 %v1733
    %v1749 = vpop.xlane.xlu0 %1748
    %v1750 = vrcp.pop 128.0
    %v1751 = vmul.f32 %v1735, %v1750
    %v1752 = vmul.f32 %v1737, %v1750
    %v1753 = vmul.f32 %v1739, %v1750
    %v1754 = vmul.f32 %v1741, %v1750
    %v1755 = vmul.f32 %v1743, %v1750
    %v1756 = vmul.f32 %v1745, %v1750
    %v1757 = vmul.f32 %v1747, %v1750
    %v1758 = vmul.f32 %v1749, %v1750
    %v1759 = vsub.f32 %v1726, %v1751
    %v1760 = vsub.f32 %v1727, %v1752
    %v1761 = vsub.f32 %v1728, %v1753
    %v1762 = vsub.f32 %v1729, %v1754
    %v1763 = vsub.f32 %v1730, %v1755
    %v1764 = vsub.f32 %v1731, %v1756
    %v1765 = vsub.f32 %v1732, %v1757
    %v1766 = vsub.f32 %v1733, %v1758
    %v1767 = vmul.f32 %v1759, %v1759
    %v1768 = vmul.f32 %v1760, %v1760
    %v1769 = vmul.f32 %v1761, %v1761
    %v1770 = vmul.f32 %v1762, %v1762
    %v1771 = vmul.f32 %v1763, %v1763
    %v1772 = vmul.f32 %v1764, %v1764
    %v1773 = vmul.f32 %v1765, %v1765
    %v1774 = vmul.f32 %v1766, %v1766
    %1775 = vadd.xlane.f32.xlu0 %v1767
    %v1776 = vpop.xlane.xlu0 %1775
    %1777 = vadd.xlane.f32.xlu0 %v1768
    %v1778 = vpop.xlane.xlu0 %1777
    %1779 = vadd.xlane.f32.xlu0 %v1769
    %v1780 = vpop.xlane.xlu0 %1779
    %1781 = vadd.xlane.f32.xlu0 %v1770
    %v1782 = vpop.xlane.xlu0 %1781
    %1783 = vadd.xlane.f32.xlu0 %v1771
    %v1784 = vpop.xlane.xlu0 %1783
    %1785 = vadd.xlane.f32.xlu0 %v1772
    %v1786 = vpop.xlane.xlu0 %1785
    %1787 = vadd.xlane.f32.xlu0 %v1773
    %v1788 = vpop.xlane.xlu0 %1787
    %1789 = vadd.xlane.f32.xlu0 %v1774
    %v1790 = vpop.xlane.xlu0 %1789
    %v1791 = vmul.f32 %v1776, %v1750
    %v1792 = vmul.f32 %v1778, %v1750
    %v1793 = vmul.f32 %v1780, %v1750
    %v1794 = vmul.f32 %v1782, %v1750
    %v1795 = vmul.f32 %v1784, %v1750
    %v1796 = vmul.f32 %v1786, %v1750
    %v1797 = vmul.f32 %v1788, %v1750
    %v1798 = vmul.f32 %v1790, %v1750
    %v1799 = vadd.f32 %v1791, 1e-05
    %v1800 = vadd.f32 %v1792, 1e-05
    %v1801 = vadd.f32 %v1793, 1e-05
    %v1802 = vadd.f32 %v1794, 1e-05
    %v1803 = vadd.f32 %v1795, 1e-05
    %v1804 = vadd.f32 %v1796, 1e-05
    %v1805 = vadd.f32 %v1797, 1e-05
    %v1806 = vadd.f32 %v1798, 1e-05
    %v1807 = vrsqrt.pop %v1799
    %v1808 = vrsqrt.pop %v1800
    %v1809 = vrsqrt.pop %v1801
    %v1810 = vrsqrt.pop %v1802
    %v1811 = vrsqrt.pop %v1803
    %v1812 = vrsqrt.pop %v1804
    %v1813 = vrsqrt.pop %v1805
    %v1814 = vrsqrt.pop %v1806
    %v1815 = vlaneseq
    %v1816 = vshrl.u32 %v1815, 7
    %v1817 = vsub.s32 1, %v1816
    %v1818 = vrot.slane %v92, %v1817
    %v1819 = vmul.f32 %v1818, %v1807
    %v1820 = vmul.f32 %v1818, %v1808
    %v1821 = vmul.f32 %v1818, %v1809
    %v1822 = vmul.f32 %v1818, %v1810
    %v1823 = vmul.f32 %v1818, %v1811
    %v1824 = vmul.f32 %v1818, %v1812
    %v1825 = vmul.f32 %v1818, %v1813
    %v1826 = vmul.f32 %v1818, %v1814
    %v1827 = vmul.f32 %v1759, %v1819
    %v1828 = vmul.f32 %v1760, %v1820
    %v1829 = vmul.f32 %v1761, %v1821
    %v1830 = vmul.f32 %v1762, %v1822
    %v1831 = vmul.f32 %v1763, %v1823
    %v1832 = vmul.f32 %v1764, %v1824
    %v1833 = vmul.f32 %v1765, %v1825
    %v1834 = vmul.f32 %v1766, %v1826
    %v1835 = vlaneseq
    %v1836 = vshrl.u32 %v1835, 7
    %v1837 = vsub.s32 2, %v1836
    %v1838 = vrot.slane %v92, %v1837
    %v1839 = vadd.f32 %v1827, %v1838
    %v1840 = vadd.f32 %v1828, %v1838
    %v1841 = vadd.f32 %v1829, %v1838
    %v1842 = vadd.f32 %v1830, %v1838
    %v1843 = vadd.f32 %v1831, %v1838
    %v1844 = vadd.f32 %v1832, %v1838
    %v1845 = vadd.f32 %v1833, %v1838
    %v1846 = vadd.f32 %v1834, %v1838
    %s1847 = scalar_lea.vmem [#allocation8], 128
    %v1848 = vld [vmem:[%s1847] sm:$0xff]
    %v1849 = vld [vmem:[%s1847 + $0x8] sm:$0xff]
    %v1850 = vld [vmem:[%s1847 + $0x10] sm:$0xff]
    %v1851 = vld [vmem:[%s1847 + $0x18] sm:$0xff]
    %v1852 = vld [vmem:[%s1847 + $0x20] sm:$0xff]
    %v1853 = vld [vmem:[%s1847 + $0x28] sm:$0xff]
    %v1854 = vld [vmem:[%s1847 + $0x30] sm:$0xff]
    %v1855 = vld [vmem:[%s1847 + $0x38] sm:$0xff]
    %v1856 = vld [vmem:[%s1847 + $0x40] sm:$0xff]
    %v1857 = vld [vmem:[%s1847 + $0x48] sm:$0xff]
    %v1858 = vld [vmem:[%s1847 + $0x50] sm:$0xff]
    %v1859 = vld [vmem:[%s1847 + $0x58] sm:$0xff]
    %v1860 = vld [vmem:[%s1847 + $0x60] sm:$0xff]
    %v1861 = vld [vmem:[%s1847 + $0x68] sm:$0xff]
    %v1862 = vld [vmem:[%s1847 + $0x70] sm:$0xff]
    %v1863 = vld [vmem:[%s1847 + $0x78] sm:$0xff]
    %v1864 = vlaneseq
    %v1865 = vshrl.u32 %v1864, 7
    %v1866 = vsub.s32 3, %v1865
    %v1867 = vrot.slane %v92, %v1866
    %1868 = vmatprep.subr.mxu0 0.0
    %1869 = vmatpush1.msra.mxu0 %v1848
    %1870 = vmatprep.subr.mxu0 0.0
    %1871 = vmatpush1.msra.mxu0 %v1849
    %1872 = vmatprep.subr.mxu0 0.0
    %1873 = vmatpush1.msra.mxu0 %v1850
    %1874 = vmatprep.subr.mxu0 0.0
    %1875 = vmatpush1.msra.mxu0 %v1851
    %1876 = vmatprep.subr.mxu0 0.0
    %1877 = vmatpush1.msra.mxu0 %v1852
    %1878 = vmatprep.subr.mxu0 0.0
    %1879 = vmatpush1.msra.mxu0 %v1853
    %1880 = vmatprep.subr.mxu0 0.0
    %1881 = vmatpush1.msra.mxu0 %v1854
    %1882 = vmatprep.subr.mxu0 0.0
    %1883 = vmatpush1.msra.mxu0 %v1855
    %1884 = vmatprep.subr.mxu0 0.0
    %1885 = vmatpush1.msra.mxu0 %v1856
    %1886 = vmatprep.subr.mxu0 0.0
    %1887 = vmatpush1.msra.mxu0 %v1857
    %1888 = vmatprep.subr.mxu0 0.0
    %1889 = vmatpush1.msra.mxu0 %v1858
    %1890 = vmatprep.subr.mxu0 0.0
    %1891 = vmatpush1.msra.mxu0 %v1859
    %1892 = vmatprep.subr.mxu0 0.0
    %1893 = vmatpush1.msra.mxu0 %v1860
    %1894 = vmatprep.subr.mxu0 0.0
    %1895 = vmatpush1.msra.mxu0 %v1861
    %1896 = vmatprep.subr.mxu0 0.0
    %1897 = vmatpush1.msra.mxu0 %v1862
    %1898 = vmatprep.subr.mxu0 0.0
    %1899 = vmatpush1.msra.mxu0 %v1863
    %1900 = vmatprep.subr.mxu0 0.0
    %1901 = vmatpush1.msra.mxu0 0.0
    %1902 = vmatprep.subr.mxu0 0.0
    %1903 = vmatpush1.msra.mxu0 0.0
    %1904 = vmatprep.subr.mxu0 0.0
    %1905 = vmatpush1.msra.mxu0 0.0
    %1906 = vmatprep.subr.mxu0 0.0
    %1907 = vmatpush1.msra.mxu0 0.0
    %1908 = vmatprep.subr.mxu0 0.0
    %1909 = vmatpush1.msra.mxu0 0.0
    %1910 = vmatprep.subr.mxu0 0.0
    %1911 = vmatpush1.msra.mxu0 0.0
    %1912 = vmatprep.subr.mxu0 0.0
    %1913 = vmatpush1.msra.mxu0 0.0
    %1914 = vmatprep.subr.mxu0 0.0
    %1915 = vmatpush1.msra.mxu0 0.0
    %1916 = vmatprep.subr.mxu0 0.0
    %1917 = vmatpush1.msra.mxu0 0.0
    %1918 = vmatprep.subr.mxu0 0.0
    %1919 = vmatpush1.msra.mxu0 0.0
    %1920 = vmatprep.subr.mxu0 0.0
    %1921 = vmatpush1.msra.mxu0 0.0
    %1922 = vmatprep.subr.mxu0 0.0
    %1923 = vmatpush1.msra.mxu0 0.0
    %1924 = vmatprep.subr.mxu0 0.0
    %1925 = vmatpush1.msra.mxu0 0.0
    %1926 = vmatprep.subr.mxu0 0.0
    %1927 = vmatpush1.msra.mxu0 0.0
    %1928 = vmatprep.subr.mxu0 0.0
    %1929 = vmatpush1.msra.mxu0 0.0
    %1930 = vmatprep.subr.mxu0 0.0
    %1931 = vmatpush1.msra.mxu0 0.0
    %1932 = vmatprep.mubr.f32.mxu0 0.0
    %1933 = vmatmul.mubr.f32.gmra.mrb[0].mxu0 %v1839
    %v1934 = vpop.f32.mrb[0].mxu0
    %v1935 = vadd.f32 %v1867, %v1934
    %v1936 = vpop.f32.mrb[0].mxu0
    %1937 = vmatprep.mubr.f32.mxu0 0.0
    %1938 = vmatmul.mubr.f32.gmra.mrb[0].mxu0 %v1840
    %v1939 = vpop.f32.mrb[0].mxu0
    %v1940 = vadd.f32 %v1867, %v1939
    %v1941 = vpop.f32.mrb[0].mxu0
    %1942 = vmatprep.mubr.f32.mxu0 0.0
    %1943 = vmatmul.mubr.f32.gmra.mrb[0].mxu0 %v1841
    %v1944 = vpop.f32.mrb[0].mxu0
    %v1945 = vadd.f32 %v1867, %v1944
    %v1946 = vpop.f32.mrb[0].mxu0
    %1947 = vmatprep.mubr.f32.mxu0 0.0
    %1948 = vmatmul.mubr.f32.gmra.mrb[0].mxu0 %v1842
    %v1949 = vpop.f32.mrb[0].mxu0
    %v1950 = vadd.f32 %v1867, %v1949
    %v1951 = vpop.f32.mrb[0].mxu0
    %1952 = vmatprep.mubr.f32.mxu0 0.0
    %1953 = vmatmul.mubr.f32.gmra.mrb[0].mxu0 %v1843
    %v1954 = vpop.f32.mrb[0].mxu0
    %v1955 = vadd.f32 %v1867, %v1954
    %v1956 = vpop.f32.mrb[0].mxu0
    %1957 = vmatprep.mubr.f32.mxu0 0.0
    %1958 = vmatmul.mubr.f32.gmra.mrb[0].mxu0 %v1844
    %v1959 = vpop.f32.mrb[0].mxu0
    %v1960 = vadd.f32 %v1867, %v1959
    %v1961 = vpop.f32.mrb[0].mxu0
    %1962 = vmatprep.mubr.f32.mxu0 0.0
    %1963 = vmatmul.mubr.f32.gmra.mrb[0].mxu0 %v1845
    %v1964 = vpop.f32.mrb[0].mxu0
    %v1965 = vadd.f32 %v1867, %v1964
    %v1966 = vpop.f32.mrb[0].mxu0
    %1967 = vmatprep.mubr.f32.mxu0 0.0
    %1968 = vmatmul.mubr.f32.gmra.mrb[0].mxu0 %v1846
    %v1969 = vpop.f32.mrb[0].mxu0
    %v1970 = vadd.f32 %v1867, %v1969
    %v1971 = vpop.f32.mrb[0].mxu0
    %1972 = vdwg.mxu0
    %v1973 = vmax.f32 %v1935, 0.0
    %v1974 = vmax.f32 %v1940, 0.0
    %v1975 = vmax.f32 %v1945, 0.0
    %v1976 = vmax.f32 %v1950, 0.0
    %v1977 = vmax.f32 %v1955, 0.0
    %v1978 = vmax.f32 %v1960, 0.0
    %v1979 = vmax.f32 %v1965, 0.0
    %v1980 = vmax.f32 %v1970, 0.0
    %1981 = vadd.xlane.f32.xlu0 %v1973
    %v1982 = vpop.xlane.xlu0 %1981
    %1983 = vadd.xlane.f32.xlu0 %v1974
    %v1984 = vpop.xlane.xlu0 %1983
    %1985 = vadd.xlane.f32.xlu0 %v1975
    %v1986 = vpop.xlane.xlu0 %1985
    %1987 = vadd.xlane.f32.xlu0 %v1976
    %v1988 = vpop.xlane.xlu0 %1987
    %1989 = vadd.xlane.f32.xlu0 %v1977
    %v1990 = vpop.xlane.xlu0 %1989
    %1991 = vadd.xlane.f32.xlu0 %v1978
    %v1992 = vpop.xlane.xlu0 %1991
    %1993 = vadd.xlane.f32.xlu0 %v1979
    %v1994 = vpop.xlane.xlu0 %1993
    %1995 = vadd.xlane.f32.xlu0 %v1980
    %v1996 = vpop.xlane.xlu0 %1995
    %v1997 = vmul.f32 %v1982, %v1750
    %v1998 = vmul.f32 %v1984, %v1750
    %v1999 = vmul.f32 %v1986, %v1750
    %v2000 = vmul.f32 %v1988, %v1750
    %v2001 = vmul.f32 %v1990, %v1750
    %v2002 = vmul.f32 %v1992, %v1750
    %v2003 = vmul.f32 %v1994, %v1750
    %v2004 = vmul.f32 %v1996, %v1750
    %v2005 = vsub.f32 %v1973, %v1997
    %v2006 = vsub.f32 %v1974, %v1998
    %v2007 = vsub.f32 %v1975, %v1999
    %v2008 = vsub.f32 %v1976, %v2000
    %v2009 = vsub.f32 %v1977, %v2001
    %v2010 = vsub.f32 %v1978, %v2002
    %v2011 = vsub.f32 %v1979, %v2003
    %v2012 = vsub.f32 %v1980, %v2004
    %v2013 = vmul.f32 %v2005, %v2005
    %v2014 = vmul.f32 %v2006, %v2006
    %v2015 = vmul.f32 %v2007, %v2007
    %v2016 = vmul.f32 %v2008, %v2008
    %v2017 = vmul.f32 %v2009, %v2009
    %v2018 = vmul.f32 %v2010, %v2010
    %v2019 = vmul.f32 %v2011, %v2011
    %v2020 = vmul.f32 %v2012, %v2012
    %2021 = vadd.xlane.f32.xlu0 %v2013
    %v2022 = vpop.xlane.xlu0 %2021
    %2023 = vadd.xlane.f32.xlu0 %v2014
    %v2024 = vpop.xlane.xlu0 %2023
    %2025 = vadd.xlane.f32.xlu0 %v2015
    %v2026 = vpop.xlane.xlu0 %2025
    %2027 = vadd.xlane.f32.xlu0 %v2016
    %v2028 = vpop.xlane.xlu0 %2027
    %2029 = vadd.xlane.f32.xlu0 %v2017
    %v2030 = vpop.xlane.xlu0 %2029
    %2031 = vadd.xlane.f32.xlu0 %v2018
    %v2032 = vpop.xlane.xlu0 %2031
    %2033 = vadd.xlane.f32.xlu0 %v2019
    %v2034 = vpop.xlane.xlu0 %2033
    %2035 = vadd.xlane.f32.xlu0 %v2020
    %v2036 = vpop.xlane.xlu0 %2035
    %v2037 = vmul.f32 %v2022, %v1750
    %v2038 = vmul.f32 %v2024, %v1750
    %v2039 = vmul.f32 %v2026, %v1750
    %v2040 = vmul.f32 %v2028, %v1750
    %v2041 = vmul.f32 %v2030, %v1750
    %v2042 = vmul.f32 %v2032, %v1750
    %v2043 = vmul.f32 %v2034, %v1750
    %v2044 = vmul.f32 %v2036, %v1750
    %v2045 = vadd.f32 %v2037, 1e-05
    %v2046 = vadd.f32 %v2038, 1e-05
    %v2047 = vadd.f32 %v2039, 1e-05
    %v2048 = vadd.f32 %v2040, 1e-05
    %v2049 = vadd.f32 %v2041, 1e-05
    %v2050 = vadd.f32 %v2042, 1e-05
    %v2051 = vadd.f32 %v2043, 1e-05
    %v2052 = vadd.f32 %v2044, 1e-05
    %v2053 = vrsqrt.pop %v2045
    %v2054 = vrsqrt.pop %v2046
    %v2055 = vrsqrt.pop %v2047
    %v2056 = vrsqrt.pop %v2048
    %v2057 = vrsqrt.pop %v2049
    %v2058 = vrsqrt.pop %v2050
    %v2059 = vrsqrt.pop %v2051
    %v2060 = vrsqrt.pop %v2052
    %v2061 = vlaneseq
    %v2062 = vshrl.u32 %v2061, 7
    %v2063 = vsub.s32 4, %v2062
    %v2064 = vrot.slane %v92, %v2063
    %v2065 = vmul.f32 %v2064, %v2053
    %v2066 = vmul.f32 %v2064, %v2054
    %v2067 = vmul.f32 %v2064, %v2055
    %v2068 = vmul.f32 %v2064, %v2056
    %v2069 = vmul.f32 %v2064, %v2057
    %v2070 = vmul.f32 %v2064, %v2058
    %v2071 = vmul.f32 %v2064, %v2059
    %v2072 = vmul.f32 %v2064, %v2060
    %v2073 = vmul.f32 %v2005, %v2065
    %v2074 = vmul.f32 %v2006, %v2066
    %v2075 = vmul.f32 %v2007, %v2067
    %v2076 = vmul.f32 %v2008, %v2068
    %v2077 = vmul.f32 %v2009, %v2069
    %v2078 = vmul.f32 %v2010, %v2070
    %v2079 = vmul.f32 %v2011, %v2071
    %v2080 = vmul.f32 %v2012, %v2072
    %v2081 = vlaneseq
    %v2082 = vshrl.u32 %v2081, 7
    %v2083 = vsub.s32 5, %v2082
    %v2084 = vrot.slane %v92, %v2083
    %v2085 = vadd.f32 %v2073, %v2084
    %v2086 = vadd.f32 %v2074, %v2084
    %v2087 = vadd.f32 %v2075, %v2084
    %v2088 = vadd.f32 %v2076, %v2084
    %v2089 = vadd.f32 %v2077, %v2084
    %v2090 = vadd.f32 %v2078, %v2084
    %v2091 = vadd.f32 %v2079, %v2084
    %v2092 = vadd.f32 %v2080, %v2084
    %2093 = vst [vmem:[#allocation10] sm:$0xff] %v2085
    %2094 = vst [vmem:[#allocation10 + $0x8] sm:$0xff] %v2086
    %2095 = vst [vmem:[#allocation10 + $0x10] sm:$0xff] %v2087
    %2096 = vst [vmem:[#allocation10 + $0x18] sm:$0xff] %v2088
    %2097 = vst [vmem:[#allocation10 + $0x20] sm:$0xff] %v2089
    %2098 = vst [vmem:[#allocation10 + $0x28] sm:$0xff] %v2090
    %2099 = vst [vmem:[#allocation10 + $0x30] sm:$0xff] %v2091
    %2100 = vst [vmem:[#allocation10 + $0x38] sm:$0xff] %v2092
    // Predicated region
    $region42: #{tpu_custom_call.1} parent=1 // pred_check
      _
    $region43: #{tpu_custom_call.1} parent=1 // pred_check_branch
      %2102 = sbr.rel (0) target = $region45
    $region44: #{tpu_custom_call.1} parent=1 // pred_region
      %s2104 = ssub.s32 1024, 1024
      %2105 = vsyncadd [#allocation4], %s2104
      %s2106 = sshll.u32 [#allocation10], 4
      %s2107 = int_to_ptr.vmem [resolvable:$true] %s2106
      %2112 = dma.vmem_to_hbm [thread:$0]  %s2107, 1024, %s6, [#allocation4], 128, 128, 8
    $region45: #{tpu_custom_call.1} parent=1 // pred_fallthru
      _
    // Predicated region
    $region46: #{tpu_custom_call.1} parent=1 // pred_check
      _
    $region47: #{tpu_custom_call.1} parent=1 // pred_check_branch
      %2114 = sbr.rel (0) target = $region49
    $region48: #{tpu_custom_call.1} parent=1 // pred_region
      %2115 = dma.done [#allocation4], 1024
    $region49: #{tpu_custom_call.1} parent=1 // pred_fallthru
      _
    %2116 = vsyncpa [#allocation3], 1
    %2117 = vsyncpa [#allocation6], 1
    %2118 = vsyncpa [#allocation9], 1
    %2119 = vsyncpa [#allocation4], 1

</llo_original>
